<compile_context>
chip_gen: v7x
topology: tpu7x:2x2x1
jax: 0.10.0
libtpu: 0.0.40
codegen_flags: <defaults>
</compile_context>

<pallas_src>
import jax
import jax.numpy as jnp
from jax.experimental import pallas as pl
from jax.experimental.pallas import tpu as pltpu


# ----------------------------------------------------------------------------------
# Pallas kernel
# ----------------------------------------------------------------------------------
def _make_kernel(K, KW, KH, Wp, L, CI, CO, P):
    """K/KW/KH: tap counts (v-width / h-width / v-height); Wp = W + 2P; L = H*Wp;
    CI/CO: channel counts padded to sublane multiples; P = (K - 1) // 2."""
    PADL = KH * Wp            # zero header (rows strictly above the image), in lanes
    L1 = PADL + L             # extent over which the width-conv result t1 is needed

    def kernel(v_ref, h_ref,                         # (1, CI, LT) each
               w1_ref, b1_ref,                       # (CO,  K*CI),  (CO, 1)
               w2_ref, b2_ref,                       # (2CO, KH*CO), (2CO, 1)
               wv_ref, bv_ref,                       # (2CO, CI),    (2CO, 1)
               wl_ref, bl_ref,                       # (2CO, 2CO),   (2CO, 1)
               wh_ref, bh_ref,                       # (2CO, KW*CI), (2CO, 1)
               wrs_ref, brs_ref,                     # (2CO, CO),    (2CO, 1)
               vout_ref, hout_ref, sout_ref):        # (1, CO, L) each
        f32 = jnp.float32

        def mm(w, x):
            return jnp.dot(w, x, preferred_element_type=f32)

        v = v_ref[0]                                 # (CI, LT)
        h = h_ref[0]

        # -- vstack 1xN (width) conv: all K taps fused into one matmul --------------
        v_taps = jnp.concatenate([v[:, j:j + L1] for j in range(K)], axis=0)   # (K*CI, L1)
        t1 = mm(w1_ref[...], v_taps) + b1_ref[...]                             # (CO, L1)
        # zero the header so the causal height taps read zeros above the image
        lane = jax.lax.broadcasted_iota(jnp.int32, (CO, L1), 1)
        t1 = jnp.where(lane >= PADL, t1, 0.0)

        # -- vstack Nx1 (height, causal) conv: taps are static lane slices of t1 ----
        t1_taps = jnp.concatenate(
            [t1[:, i * Wp:i * Wp + L] for i in range(KH)], axis=0)             # (KH*CO, L)
        t2 = mm(w2_ref[...], t1_taps) + b2_ref[...]                            # (2CO, L)

        # -- link = 1x1(vstack_pre), taken BEFORE the 1x1 add (as in PyTorch) -------
        link = mm(wl_ref[...], t2) + bl_ref[...]                               # (2CO, L)

        # -- vstack += 1x1(vstack_input); fused gated activation --------------------
        v_ctr = v[:, PADL + P:PADL + P + L]                                    # (CI, L)
        vpre = t2 + mm(wv_ref[...], v_ctr) + bv_ref[...]
        vout_ref[0] = (jnp.tanh(vpre[:CO]) * jax.nn.sigmoid(vpre[CO:])
                       ).astype(vout_ref.dtype)

        # -- hstack = gated(link + hstack_1xN(hstack_input)) ------------------------
        h_taps = jnp.concatenate(
            [h[:, PADL + j:PADL + j + L] for j in range(KW)], axis=0)          # (KW*CI, L)
        hpre = link + mm(wh_ref[...], h_taps) + bh_ref[...]
        hgate = jnp.tanh(hpre[:CO]) * jax.nn.sigmoid(hpre[CO:])                # (CO, L)

        # -- fused residual / skip 1x1 convs -----------------------------------------
        rs = mm(wrs_ref[...], hgate) + brs_ref[...]                            # (2CO, L)
        # mask_center=False -> residual connection to hstack_input (needs Cin == Cout)
        hout_ref[0] = (rs[:CO] + h[:, PADL + P:PADL + P + L]).astype(hout_ref.dtype)
        sout_ref[0] = rs[CO:].astype(sout_ref.dtype)

    return kernel


# ----------------------------------------------------------------------------------
# Wrapper: layout plumbing + pallas_call
# ----------------------------------------------------------------------------------
def gated_pixelcnn_layer(v_in, h_in, params, kernel_size=3, mask_center=False):
    assert kernel_size % 2 == 1, "kernel_size cannot be even"
    assert not mask_center, "only mask_center=False (module default) is implemented"
    B, Cin, H, W = v_in.shape
    K = kernel_size
    P = (K - 1) // 2
    KH = P + 1                      # vstack_Nx1 taps (rows strictly above)
    KW = P + 1                      # hstack_1xN taps (columns to the left + centre)
    Cout = params["w_res"].shape[0]
    assert Cin == Cout, "residual add in the module requires in_channels == out_channels"

    f32 = jnp.float32
    CI = -(-Cin // 8) * 8           # channel dims padded to sublane multiples so all
    CO = -(-Cout // 8) * 8          # in-kernel sublane concats / splits are aligned
    C2 = 2 * CO
    Wp = W + 2 * P                  # width-padded row length
    L = H * Wp                      # flat spatial extent of one image
    PADL = KH * Wp                  # zero header for the causal height taps
    LT = PADL + L + (K - 1)         # header + data + tail (so every tap is a slice)

    # ---- inputs: exactly one padded, channel-first, flattened copy per image ------
    def prep(x):                    # NCHW -> (B, CI, LT)
        xp = jnp.pad(x.astype(f32), ((0, 0), (0, CI - Cin), (0, 0), (P, P)))
        return jnp.pad(xp.reshape(B, CI, L), ((0, 0), (0, 0), (PADL, K - 1)))

    v_flat = prep(v_in)
    h_flat = prep(h_in)

    # ---- weights: channel-first, taps fused along contraction, gate halves fused
    #      along the output dim (tanh half at rows [0,Cout), sigmoid half at
    #      rows [CO, CO+Cout)), zero-padded to the padded channel counts ------------
    def pad_in(w, ip):              # pad axis 1 (input channels) to ip
        return jnp.zeros((w.shape[0], ip) + w.shape[2:], f32).at[:, :w.shape[1]].set(w)

    def pad_out(w):                 # pad axis 0 (plain, non-gated outputs) to CO
        return jnp.zeros((CO,) + w.shape[1:], f32).at[:w.shape[0]].set(w)

    def gate_rows(w):               # (2*Cout, ...) -> (2*CO, ...), halves at 0 / CO
        z = jnp.zeros((C2,) + w.shape[1:], f32)
        return z.at[:Cout].set(w[:Cout]).at[CO:CO + Cout].set(w[Cout:])

    def pack_taps(w):               # (O', I', T) -> (O', T*I'), tap-major contraction
        return jnp.transpose(w, (0, 2, 1)).reshape(w.shape[0], -1)

    p = {k: jnp.asarray(a, f32) for k, a in params.items()}
    w1 = pack_taps(pad_out(pad_in(p["w_v1xN"][:, :, 0, :], CI)))               # (CO, K*CI)
    b1 = pad_out(p["b_v1xN"].reshape(Cout, 1))
    w2 = pack_taps(gate_rows(pad_in(p["w_vNx1"][:, :, :, 0], CO)))             # (2CO, KH*CO)
    b2 = gate_rows(p["b_vNx1"].reshape(2 * Cout, 1))
    wv = gate_rows(pad_in(p["w_v1x1"][:, :, 0, 0], CI))                        # (2CO, CI)
    bv = gate_rows(p["b_v1x1"].reshape(2 * Cout, 1))
    wl = gate_rows(gate_rows(p["w_link"][:, :, 0, 0]).T).T                     # (2CO, 2CO)
    bl = gate_rows(p["b_link"].reshape(2 * Cout, 1))
    wh = pack_taps(gate_rows(pad_in(p["w_h1xN"][:, :, 0, :], CI)))             # (2CO, KW*CI)
    bh = gate_rows(p["b_h1xN"].reshape(2 * Cout, 1))
    wrs = gate_rows(pad_in(jnp.concatenate(
        [p["w_res"][:, :, 0, 0], p["w_skip"][:, :, 0, 0]], axis=0), CO))       # (2CO, CO)
    brs = gate_rows(jnp.concatenate([p["b_res"], p["b_skip"]]).reshape(2 * Cout, 1))
    # TODO(synk): cast the matmul operands above (and v_flat/h_flat) to bf16 on
    #             v6e/v7x for ~2x MXU throughput and half the memory traffic.

    def rep(shape):                 # weights/biases: resident across all grid steps
        return pl.BlockSpec(shape, lambda b: (0, 0))

    in_specs = [
        pl.BlockSpec((1, CI, LT), lambda b: (b, 0, 0)),
        pl.BlockSpec((1, CI, LT), lambda b: (b, 0, 0)),
        rep(w1.shape), rep(b1.shape),
        rep(w2.shape), rep(b2.shape),
        rep(wv.shape), rep(bv.shape),
        rep(wl.shape), rep(bl.shape),
        rep(wh.shape), rep(bh.shape),
        rep(wrs.shape), rep(brs.shape),
    ]
    out_specs = tuple(pl.BlockSpec((1, CO, L), lambda b: (b, 0, 0)) for _ in range(3))
    out_shape = tuple(jax.ShapeDtypeStruct((B, CO, L), f32) for _ in range(3))

    vflat, hflat, sflat = pl.pallas_call(
        _make_kernel(K, KW, KH, Wp, L, CI, CO, P),
        grid=(B,),
        in_specs=in_specs,
        out_specs=out_specs,
        out_shape=out_shape,
        compiler_params=pltpu.CompilerParams(dimension_semantics=("parallel",)),
    )(v_flat, h_flat, w1, b1, w2, b2, wv, bv, wl, bl, wh, bh, wrs, brs)

    def to_nchw(x):                 # (B, CO, H*Wp) -> NCHW, dropping channel/width pads
        return x[:, :Cout].reshape(B, Cout, H, Wp)[:, :, :, :W]

    return to_nchw(vflat), to_nchw(hflat), to_nchw(sflat)


# ----------------------------------------------------------------------------------
# Deterministic parameter init (torch Conv2d weight layout: OIHW)
# ----------------------------------------------------------------------------------
def init_params(key, in_channels, out_channels, kernel_size=3):
    K = kernel_size
    P = (K - 1) // 2
    Cin, Cout = in_channels, out_channels
    ks = jax.random.split(key, 14)

    def w(k, shape, fan_in):
        return jax.random.normal(k, shape, jnp.float32) / jnp.sqrt(float(fan_in))

    def b(k, n):
        return 0.01 * jax.random.normal(k, (n,), jnp.float32)

    return {
        "w_v1xN": w(ks[0], (Cout, Cin, 1, K), Cin * K),        "b_v1xN": b(ks[1], Cout),
        "w_vNx1": w(ks[2], (2 * Cout, Cout, P + 1, 1), Cout * (P + 1)),
        "b_vNx1": b(ks[3], 2 * Cout),
        "w_v1x1": w(ks[4], (2 * Cout, Cin, 1, 1), Cin),        "b_v1x1": b(ks[5], 2 * Cout),
        "w_link": w(ks[6], (2 * Cout, 2 * Cout, 1, 1), 2 * Cout),
        "b_link": b(ks[7], 2 * Cout),
        "w_h1xN": w(ks[8], (2 * Cout, Cin, 1, P + 1), Cin * (P + 1)),
        "b_h1xN": b(ks[9], 2 * Cout),
        "w_res": w(ks[10], (Cout, Cout, 1, 1), Cout),          "b_res": b(ks[11], Cout),
        "w_skip": w(ks[12], (Cout, Cout, 1, 1), Cout),         "b_skip": b(ks[13], Cout),
    }


# ----------------------------------------------------------------------------------
# Pure-JAX reference (mirrors the PyTorch forward exactly) for validation
# ----------------------------------------------------------------------------------
def _conv(x, w, bias, ph, pw):
    y = jax.lax.conv_general_dilated(
        x, w, (1, 1), ((ph, ph), (pw, pw)),
        dimension_numbers=("NCHW", "OIHW", "NCHW"),
        precision=jax.lax.Precision.HIGHEST)
    return y + bias[None, :, None, None]


def _gated(x):  # chunk(2, dim=1): tanh(first half) * sigmoid(second half)
    a, g = jnp.split(x, 2, axis=1)
    return jnp.tanh(a) * jax.nn.sigmoid(g)


def reference_forward(v_in, h_in, p, kernel_size=3, mask_center=False):
    _, _, H, W = v_in.shape
    P = (kernel_size - 1) // 2
    vstack = _conv(_conv(v_in, p["w_v1xN"], p["b_v1xN"], 0, P),
                   p["w_vNx1"], p["b_vNx1"], P + 1, 0)[:, :, :H, :]
    link = _conv(vstack, p["w_link"], p["b_link"], 0, 0)
    vstack = vstack + _conv(v_in, p["w_v1x1"], p["b_v1x1"], 0, 0)
    vstack = _gated(vstack)
    hstack = link + _conv(h_in, p["w_h1xN"], p["b_h1xN"], 0, P + int(mask_center))[:, :, :, :W]
    hstack = _gated(hstack)
    skip = _conv(hstack, p["w_skip"], p["b_skip"], 0, 0)
    hstack = _conv(hstack, p["w_res"], p["b_res"], 0, 0)
    if not mask_center:
        hstack = hstack + h_in
    return vstack, hstack, skip


# ----------------------------------------------------------------------------------
if __name__ == "__main__":
    key = jax.random.PRNGKey(0)
    kv, kh, kp = jax.random.split(key, 3)
    B, C, H, W = 2, 4, 16, 16           # in_channels == out_channels (module residual)
    KSIZE = 3

    v_in = jax.random.normal(kv, (B, C, H, W), jnp.float32)
    h_in = jax.random.normal(kh, (B, C, H, W), jnp.float32)
    params = init_params(kp, C, C, KSIZE)

    vstack, hstack, skip = gated_pixelcnn_layer(v_in, h_in, params, kernel_size=KSIZE)
    jax.block_until_ready((vstack, hstack, skip))

    v_ref, h_ref, s_ref = reference_forward(v_in, h_in, params, kernel_size=KSIZE)
    for got, want in ((vstack, v_ref), (hstack, h_ref), (skip, s_ref)):
        assert got.shape == want.shape, (got.shape, want.shape)
        err = float(jnp.max(jnp.abs(got - want)))
        assert err < 1e-3, f"max abs err {err}"

    print("KERNEL_OK")
</pallas_src>

<mosaic_0001>
module attributes {stable_mosaic.version = 11 : i64} {
  func.func @kernel(%arg0: i32, %arg1: memref<1x8x326xf32, #tpu.memory_space<vmem>>, %arg2: memref<1x8x326xf32, #tpu.memory_space<vmem>>, %arg3: memref<8x24xf32, #tpu.memory_space<vmem>>, %arg4: memref<8x1xf32, #tpu.memory_space<vmem>>, %arg5: memref<16x16xf32, #tpu.memory_space<vmem>>, %arg6: memref<16x1xf32, #tpu.memory_space<vmem>>, %arg7: memref<16x8xf32, #tpu.memory_space<vmem>>, %arg8: memref<16x1xf32, #tpu.memory_space<vmem>>, %arg9: memref<16x16xf32, #tpu.memory_space<vmem>>, %arg10: memref<16x1xf32, #tpu.memory_space<vmem>>, %arg11: memref<16x16xf32, #tpu.memory_space<vmem>>, %arg12: memref<16x1xf32, #tpu.memory_space<vmem>>, %arg13: memref<16x8xf32, #tpu.memory_space<vmem>>, %arg14: memref<16x1xf32, #tpu.memory_space<vmem>>, %arg15: memref<1x8x288xf32, #tpu.memory_space<vmem>>, %arg16: memref<1x8x288xf32, #tpu.memory_space<vmem>>, %arg17: memref<1x8x288xf32, #tpu.memory_space<vmem>>) attributes {dimension_semantics = [#tpu.dimension_semantics<parallel>], iteration_bounds = array<i64: 2>, scalar_prefetch = 0 : i64, scratch_operands = 0 : i64, tpu.core_type = #tpu.core_type<tc>, window_params = [{transform_indices = @transform_0, window_bounds = array<i64: 1, 8, 326>}, {transform_indices = @transform_1, window_bounds = array<i64: 1, 8, 326>}, {pipeline_mode = #tpu.pipeline_mode<synchronous>, transform_indices = @transform_2, window_bounds = array<i64: 8, 24>}, {pipeline_mode = #tpu.pipeline_mode<synchronous>, transform_indices = @transform_3, window_bounds = array<i64: 8, 1>}, {pipeline_mode = #tpu.pipeline_mode<synchronous>, transform_indices = @transform_4, window_bounds = array<i64: 16, 16>}, {pipeline_mode = #tpu.pipeline_mode<synchronous>, transform_indices = @transform_5, window_bounds = array<i64: 16, 1>}, {pipeline_mode = #tpu.pipeline_mode<synchronous>, transform_indices = @transform_6, window_bounds = array<i64: 16, 8>}, {pipeline_mode = #tpu.pipeline_mode<synchronous>, transform_indices = @transform_7, window_bounds = array<i64: 16, 1>}, {pipeline_mode = #tpu.pipeline_mode<synchronous>, transform_indices = @transform_8, window_bounds = array<i64: 16, 16>}, {pipeline_mode = #tpu.pipeline_mode<synchronous>, transform_indices = @transform_9, window_bounds = array<i64: 16, 1>}, {pipeline_mode = #tpu.pipeline_mode<synchronous>, transform_indices = @transform_10, window_bounds = array<i64: 16, 16>}, {pipeline_mode = #tpu.pipeline_mode<synchronous>, transform_indices = @transform_11, window_bounds = array<i64: 16, 1>}, {pipeline_mode = #tpu.pipeline_mode<synchronous>, transform_indices = @transform_12, window_bounds = array<i64: 16, 8>}, {pipeline_mode = #tpu.pipeline_mode<synchronous>, transform_indices = @transform_13, window_bounds = array<i64: 16, 1>}, {transform_indices = @transform_14, window_bounds = array<i64: 1, 8, 288>}, {transform_indices = @transform_15, window_bounds = array<i64: 1, 8, 288>}, {transform_indices = @transform_16, window_bounds = array<i64: 1, 8, 288>}]} {
    %c0 = arith.constant 0 : index
    %c0_0 = arith.constant 0 : index
    %c0_1 = arith.constant 0 : index
    %0 = vector.load %arg1[%c0, %c0_0, %c0_1] : memref<1x8x326xf32, #tpu.memory_space<vmem>>, vector<1x8x326xf32>
    %1 = vector.shape_cast %0 : vector<1x8x326xf32> to vector<8x326xf32>
    %c0_2 = arith.constant 0 : index
    %c0_3 = arith.constant 0 : index
    %c0_4 = arith.constant 0 : index
    %2 = vector.load %arg2[%c0_2, %c0_3, %c0_4] : memref<1x8x326xf32, #tpu.memory_space<vmem>>, vector<1x8x326xf32>
    %3 = vector.shape_cast %2 : vector<1x8x326xf32> to vector<8x326xf32>
    %4 = vector.extract_strided_slice %1 {offsets = [0, 0], sizes = [8, 324], strides = [1, 1]} : vector<8x326xf32> to vector<8x324xf32>
    %5 = vector.extract_strided_slice %1 {offsets = [0, 1], sizes = [8, 324], strides = [1, 1]} : vector<8x326xf32> to vector<8x324xf32>
    %6 = vector.extract_strided_slice %1 {offsets = [0, 2], sizes = [8, 324], strides = [1, 1]} : vector<8x326xf32> to vector<8x324xf32>
    %7 = tpu.concatenate %4, %5, %6 in 0 : vector<8x324xf32>, vector<8x324xf32>, vector<8x324xf32> -> vector<24x324xf32>
    %c0_5 = arith.constant 0 : index
    %c0_6 = arith.constant 0 : index
    %8 = vector.load %arg3[%c0_5, %c0_6] : memref<8x24xf32, #tpu.memory_space<vmem>>, vector<8x24xf32>
    %cst = arith.constant dense<0.000000e+00> : vector<8x324xf32>
    %9 = tpu.matmul %8, %7, %cst {dimension_numbers = #tpu.dot_dimension_numbers<[1], [0], [0], [1], [0, 0, 1, 1], [], []>} : vector<8x24xf32>, vector<24x324xf32>, vector<8x324xf32> -> vector<8x324xf32>
    %c0_7 = arith.constant 0 : index
    %c0_8 = arith.constant 0 : index
    %10 = vector.load %arg4[%c0_7, %c0_8] : memref<8x1xf32, #tpu.memory_space<vmem>>, vector<8x1xf32>
    %11 = vector.broadcast %10 : vector<8x1xf32> to vector<8x324xf32>
    %12 = arith.addf %9, %11 : vector<8x324xf32>
    %13 = tpu.iota {dimensions = array<i32: 1>} : vector<8x324xi32>
    %c36_i32 = arith.constant 36 : i32
    %14 = vector.broadcast %c36_i32 : i32 to vector<8x324xi32>
    %15 = arith.cmpi sge, %13, %14 : vector<8x324xi32>
    %cst_9 = arith.constant 0.000000e+00 : f32
    %16 = vector.broadcast %cst_9 : f32 to vector<8x324xf32>
    %17 = arith.select %15, %12, %16 : vector<8x324xi1>, vector<8x324xf32>
    %18 = vector.extract_strided_slice %17 {offsets = [0, 0], sizes = [8, 288], strides = [1, 1]} : vector<8x324xf32> to vector<8x288xf32>
    %19 = vector.extract_strided_slice %17 {offsets = [0, 18], sizes = [8, 288], strides = [1, 1]} : vector<8x324xf32> to vector<8x288xf32>
    %20 = tpu.concatenate %18, %19 in 0 : vector<8x288xf32>, vector<8x288xf32> -> vector<16x288xf32>
    %c0_10 = arith.constant 0 : index
    %c0_11 = arith.constant 0 : index
    %21 = vector.load %arg5[%c0_10, %c0_11] : memref<16x16xf32, #tpu.memory_space<vmem>>, vector<16x16xf32>
    %cst_12 = arith.constant dense<0.000000e+00> : vector<16x288xf32>
    %22 = tpu.matmul %21, %20, %cst_12 {dimension_numbers = #tpu.dot_dimension_numbers<[1], [0], [0], [1], [0, 0, 1, 1], [], []>} : vector<16x16xf32>, vector<16x288xf32>, vector<16x288xf32> -> vector<16x288xf32>
    %c0_13 = arith.constant 0 : index
    %c0_14 = arith.constant 0 : index
    %23 = vector.load %arg6[%c0_13, %c0_14] : memref<16x1xf32, #tpu.memory_space<vmem>>, vector<16x1xf32>
    %24 = vector.broadcast %23 : vector<16x1xf32> to vector<16x288xf32>
    %25 = arith.addf %22, %24 : vector<16x288xf32>
    %c0_15 = arith.constant 0 : index
    %c0_16 = arith.constant 0 : index
    %26 = vector.load %arg9[%c0_15, %c0_16] : memref<16x16xf32, #tpu.memory_space<vmem>>, vector<16x16xf32>
    %cst_17 = arith.constant dense<0.000000e+00> : vector<16x288xf32>
    %27 = tpu.matmul %26, %25, %cst_17 {dimension_numbers = #tpu.dot_dimension_numbers<[1], [0], [0], [1], [0, 0, 1, 1], [], []>} : vector<16x16xf32>, vector<16x288xf32>, vector<16x288xf32> -> vector<16x288xf32>
    %c0_18 = arith.constant 0 : index
    %c0_19 = arith.constant 0 : index
    %28 = vector.load %arg10[%c0_18, %c0_19] : memref<16x1xf32, #tpu.memory_space<vmem>>, vector<16x1xf32>
    %29 = vector.broadcast %28 : vector<16x1xf32> to vector<16x288xf32>
    %30 = arith.addf %27, %29 : vector<16x288xf32>
    %31 = vector.extract_strided_slice %1 {offsets = [0, 37], sizes = [8, 288], strides = [1, 1]} : vector<8x326xf32> to vector<8x288xf32>
    %c0_20 = arith.constant 0 : index
    %c0_21 = arith.constant 0 : index
    %32 = vector.load %arg7[%c0_20, %c0_21] : memref<16x8xf32, #tpu.memory_space<vmem>>, vector<16x8xf32>
    %cst_22 = arith.constant dense<0.000000e+00> : vector<16x288xf32>
    %33 = tpu.matmul %32, %31, %cst_22 {dimension_numbers = #tpu.dot_dimension_numbers<[1], [0], [0], [1], [0, 0, 1, 1], [], []>} : vector<16x8xf32>, vector<8x288xf32>, vector<16x288xf32> -> vector<16x288xf32>
    %34 = arith.addf %25, %33 : vector<16x288xf32>
    %c0_23 = arith.constant 0 : index
    %c0_24 = arith.constant 0 : index
    %35 = vector.load %arg8[%c0_23, %c0_24] : memref<16x1xf32, #tpu.memory_space<vmem>>, vector<16x1xf32>
    %36 = vector.broadcast %35 : vector<16x1xf32> to vector<16x288xf32>
    %37 = arith.addf %34, %36 : vector<16x288xf32>
    %38 = vector.extract_strided_slice %37 {offsets = [0, 0], sizes = [8, 288], strides = [1, 1]} : vector<16x288xf32> to vector<8x288xf32>
    %39 = math.tanh %38 : vector<8x288xf32>
    %40 = vector.extract_strided_slice %37 {offsets = [8, 0], sizes = [8, 288], strides = [1, 1]} : vector<16x288xf32> to vector<8x288xf32>
    %41 = arith.negf %40 : vector<8x288xf32>
    %42 = math.exp %41 : vector<8x288xf32>
    %cst_25 = arith.constant 1.000000e+00 : f32
    %43 = vector.broadcast %cst_25 : f32 to vector<8x288xf32>
    %44 = arith.addf %43, %42 : vector<8x288xf32>
    %45 = arith.divf %43, %44 : vector<8x288xf32>
    %46 = arith.mulf %39, %45 : vector<8x288xf32>
    %c0_26 = arith.constant 0 : index
    %c0_27 = arith.constant 0 : index
    %c0_28 = arith.constant 0 : index
    %47 = vector.load %arg15[%c0_26, %c0_27, %c0_28] : memref<1x8x288xf32, #tpu.memory_space<vmem>>, vector<1x8x288xf32>
    %48 = vector.shape_cast %47 : vector<1x8x288xf32> to vector<8x288xf32>
    %49 = vector.shape_cast %46 : vector<8x288xf32> to vector<1x8x288xf32>
    tpu.vector_store %arg15[%c0_26, %c0_27, %c0_28], %49 {strides = array<i32>} : memref<1x8x288xf32, #tpu.memory_space<vmem>>, vector<1x8x288xf32>,
    %50 = vector.extract_strided_slice %3 {offsets = [0, 36], sizes = [8, 288], strides = [1, 1]} : vector<8x326xf32> to vector<8x288xf32>
    %51 = vector.extract_strided_slice %3 {offsets = [0, 37], sizes = [8, 288], strides = [1, 1]} : vector<8x326xf32> to vector<8x288xf32>
    %52 = tpu.concatenate %50, %51 in 0 : vector<8x288xf32>, vector<8x288xf32> -> vector<16x288xf32>
    %c0_29 = arith.constant 0 : index
    %c0_30 = arith.constant 0 : index
    %53 = vector.load %arg11[%c0_29, %c0_30] : memref<16x16xf32, #tpu.memory_space<vmem>>, vector<16x16xf32>
    %cst_31 = arith.constant dense<0.000000e+00> : vector<16x288xf32>
    %54 = tpu.matmul %53, %52, %cst_31 {dimension_numbers = #tpu.dot_dimension_numbers<[1], [0], [0], [1], [0, 0, 1, 1], [], []>} : vector<16x16xf32>, vector<16x288xf32>, vector<16x288xf32> -> vector<16x288xf32>
    %55 = arith.addf %30, %54 : vector<16x288xf32>
    %c0_32 = arith.constant 0 : index
    %c0_33 = arith.constant 0 : index
    %56 = vector.load %arg12[%c0_32, %c0_33] : memref<16x1xf32, #tpu.memory_space<vmem>>, vector<16x1xf32>
    %57 = vector.broadcast %56 : vector<16x1xf32> to vector<16x288xf32>
    %58 = arith.addf %55, %57 : vector<16x288xf32>
    %59 = vector.extract_strided_slice %58 {offsets = [0, 0], sizes = [8, 288], strides = [1, 1]} : vector<16x288xf32> to vector<8x288xf32>
    %60 = math.tanh %59 : vector<8x288xf32>
    %61 = vector.extract_strided_slice %58 {offsets = [8, 0], sizes = [8, 288], strides = [1, 1]} : vector<16x288xf32> to vector<8x288xf32>
    %62 = arith.negf %61 : vector<8x288xf32>
    %63 = math.exp %62 : vector<8x288xf32>
    %cst_34 = arith.constant 1.000000e+00 : f32
    %64 = vector.broadcast %cst_34 : f32 to vector<8x288xf32>
    %65 = arith.addf %64, %63 : vector<8x288xf32>
    %66 = arith.divf %64, %65 : vector<8x288xf32>
    %67 = arith.mulf %60, %66 : vector<8x288xf32>
    %c0_35 = arith.constant 0 : index
    %c0_36 = arith.constant 0 : index
    %68 = vector.load %arg13[%c0_35, %c0_36] : memref<16x8xf32, #tpu.memory_space<vmem>>, vector<16x8xf32>
    %cst_37 = arith.constant dense<0.000000e+00> : vector<16x288xf32>
    %69 = tpu.matmul %68, %67, %cst_37 {dimension_numbers = #tpu.dot_dimension_numbers<[1], [0], [0], [1], [0, 0, 1, 1], [], []>} : vector<16x8xf32>, vector<8x288xf32>, vector<16x288xf32> -> vector<16x288xf32>
    %c0_38 = arith.constant 0 : index
    %c0_39 = arith.constant 0 : index
    %70 = vector.load %arg14[%c0_38, %c0_39] : memref<16x1xf32, #tpu.memory_space<vmem>>, vector<16x1xf32>
    %71 = vector.broadcast %70 : vector<16x1xf32> to vector<16x288xf32>
    %72 = arith.addf %69, %71 : vector<16x288xf32>
    %73 = vector.extract_strided_slice %72 {offsets = [0, 0], sizes = [8, 288], strides = [1, 1]} : vector<16x288xf32> to vector<8x288xf32>
    %74 = vector.extract_strided_slice %3 {offsets = [0, 37], sizes = [8, 288], strides = [1, 1]} : vector<8x326xf32> to vector<8x288xf32>
    %75 = arith.addf %73, %74 : vector<8x288xf32>
    %c0_40 = arith.constant 0 : index
    %c0_41 = arith.constant 0 : index
    %c0_42 = arith.constant 0 : index
    %76 = vector.load %arg16[%c0_40, %c0_41, %c0_42] : memref<1x8x288xf32, #tpu.memory_space<vmem>>, vector<1x8x288xf32>
    %77 = vector.shape_cast %76 : vector<1x8x288xf32> to vector<8x288xf32>
    %78 = vector.shape_cast %75 : vector<8x288xf32> to vector<1x8x288xf32>
    tpu.vector_store %arg16[%c0_40, %c0_41, %c0_42], %78 {strides = array<i32>} : memref<1x8x288xf32, #tpu.memory_space<vmem>>, vector<1x8x288xf32>,
    %79 = vector.extract_strided_slice %72 {offsets = [8, 0], sizes = [8, 288], strides = [1, 1]} : vector<16x288xf32> to vector<8x288xf32>
    %c0_43 = arith.constant 0 : index
    %c0_44 = arith.constant 0 : index
    %c0_45 = arith.constant 0 : index
    %80 = vector.load %arg17[%c0_43, %c0_44, %c0_45] : memref<1x8x288xf32, #tpu.memory_space<vmem>>, vector<1x8x288xf32>
    %81 = vector.shape_cast %80 : vector<1x8x288xf32> to vector<8x288xf32>
    %82 = vector.shape_cast %79 : vector<8x288xf32> to vector<1x8x288xf32>
    tpu.vector_store %arg17[%c0_43, %c0_44, %c0_45], %82 {strides = array<i32>} : memref<1x8x288xf32, #tpu.memory_space<vmem>>, vector<1x8x288xf32>,
    return
  }
  func.func @transform_0(%arg0: i32) -> (i32, i32, i32) {
    %c0_i32 = arith.constant 0 : i32
    %c0_i32_0 = arith.constant 0 : i32
    %c0_i32_1 = arith.constant 0 : i32
    return %arg0, %c0_i32, %c0_i32_0 : i32, i32, i32
  }
  func.func @transform_1(%arg0: i32) -> (i32, i32, i32) {
    %c0_i32 = arith.constant 0 : i32
    %c0_i32_0 = arith.constant 0 : i32
    %c0_i32_1 = arith.constant 0 : i32
    return %arg0, %c0_i32, %c0_i32_0 : i32, i32, i32
  }
  func.func @transform_2(%arg0: i32) -> (i32, i32) {
    %c0_i32 = arith.constant 0 : i32
    %c0_i32_0 = arith.constant 0 : i32
    %c0_i32_1 = arith.constant 0 : i32
    return %c0_i32, %c0_i32_0 : i32, i32
  }
  func.func @transform_3(%arg0: i32) -> (i32, i32) {
    %c0_i32 = arith.constant 0 : i32
    %c0_i32_0 = arith.constant 0 : i32
    %c0_i32_1 = arith.constant 0 : i32
    return %c0_i32, %c0_i32_0 : i32, i32
  }
  func.func @transform_4(%arg0: i32) -> (i32, i32) {
    %c0_i32 = arith.constant 0 : i32
    %c0_i32_0 = arith.constant 0 : i32
    %c0_i32_1 = arith.constant 0 : i32
    return %c0_i32, %c0_i32_0 : i32, i32
  }
  func.func @transform_5(%arg0: i32) -> (i32, i32) {
    %c0_i32 = arith.constant 0 : i32
    %c0_i32_0 = arith.constant 0 : i32
    %c0_i32_1 = arith.constant 0 : i32
    return %c0_i32, %c0_i32_0 : i32, i32
  }
  func.func @transform_6(%arg0: i32) -> (i32, i32) {
    %c0_i32 = arith.constant 0 : i32
    %c0_i32_0 = arith.constant 0 : i32
    %c0_i32_1 = arith.constant 0 : i32
    return %c0_i32, %c0_i32_0 : i32, i32
  }
  func.func @transform_7(%arg0: i32) -> (i32, i32) {
    %c0_i32 = arith.constant 0 : i32
    %c0_i32_0 = arith.constant 0 : i32
    %c0_i32_1 = arith.constant 0 : i32
    return %c0_i32, %c0_i32_0 : i32, i32
  }
  func.func @transform_8(%arg0: i32) -> (i32, i32) {
    %c0_i32 = arith.constant 0 : i32
    %c0_i32_0 = arith.constant 0 : i32
    %c0_i32_1 = arith.constant 0 : i32
    return %c0_i32, %c0_i32_0 : i32, i32
  }
  func.func @transform_9(%arg0: i32) -> (i32, i32) {
    %c0_i32 = arith.constant 0 : i32
    %c0_i32_0 = arith.constant 0 : i32
    %c0_i32_1 = arith.constant 0 : i32
    return %c0_i32, %c0_i32_0 : i32, i32
  }
  func.func @transform_10(%arg0: i32) -> (i32, i32) {
    %c0_i32 = arith.constant 0 : i32
    %c0_i32_0 = arith.constant 0 : i32
    %c0_i32_1 = arith.constant 0 : i32
    return %c0_i32, %c0_i32_0 : i32, i32
  }
  func.func @transform_11(%arg0: i32) -> (i32, i32) {
    %c0_i32 = arith.constant 0 : i32
    %c0_i32_0 = arith.constant 0 : i32
    %c0_i32_1 = arith.constant 0 : i32
    return %c0_i32, %c0_i32_0 : i32, i32
  }
  func.func @transform_12(%arg0: i32) -> (i32, i32) {
    %c0_i32 = arith.constant 0 : i32
    %c0_i32_0 = arith.constant 0 : i32
    %c0_i32_1 = arith.constant 0 : i32
    return %c0_i32, %c0_i32_0 : i32, i32
  }
  func.func @transform_13(%arg0: i32) -> (i32, i32) {
    %c0_i32 = arith.constant 0 : i32
    %c0_i32_0 = arith.constant 0 : i32
    %c0_i32_1 = arith.constant 0 : i32
    return %c0_i32, %c0_i32_0 : i32, i32
  }
  func.func @transform_14(%arg0: i32) -> (i32, i32, i32) {
    %c0_i32 = arith.constant 0 : i32
    %c0_i32_0 = arith.constant 0 : i32
    %c0_i32_1 = arith.constant 0 : i32
    return %arg0, %c0_i32, %c0_i32_0 : i32, i32, i32
  }
  func.func @transform_15(%arg0: i32) -> (i32, i32, i32) {
    %c0_i32 = arith.constant 0 : i32
    %c0_i32_0 = arith.constant 0 : i32
    %c0_i32_1 = arith.constant 0 : i32
    return %arg0, %c0_i32, %c0_i32_0 : i32, i32, i32
  }
  func.func @transform_16(%arg0: i32) -> (i32, i32, i32) {
    %c0_i32 = arith.constant 0 : i32
    %c0_i32_0 = arith.constant 0 : i32
    %c0_i32_1 = arith.constant 0 : i32
    return %arg0, %c0_i32, %c0_i32_0 : i32, i32, i32
  }
}

</mosaic_0001>

<llo_original>
// kernel: tpu_custom_call.1
$region0: #{tpu_custom_call.1}
  #allocation0 [shape = 'u32[]', space=smem, size = 0x4, offset = 0x4, fixed_abs, tag = 'smem constant byte address 0x4 - core index']
  #allocation1 [shape = 'u32[144,128]{1,0:T(1,128)}', space=vmem, size = 0x12000, scoped, tag = 'internal scratch']
  %s0 = inlined_call_operand.vmem [shape: f32[2,8,326], index: 0, kind: input, shape index: {}]
  %s1 = inlined_call_operand.vmem [shape: f32[2,8,326], index: 1, kind: input, shape index: {}]
  %s2 = inlined_call_operand.hbm [shape: f32[8,24], index: 2, kind: input, shape index: {}]
  %s3 = inlined_call_operand.vmem [shape: f32[8,1], index: 3, kind: input, shape index: {}]
  %s4 = inlined_call_operand.vmem [shape: f32[16,16], index: 4, kind: input, shape index: {}]
  %s5 = inlined_call_operand.vmem [shape: f32[16,1], index: 5, kind: input, shape index: {}]
  %s6 = inlined_call_operand.vmem [shape: f32[16,8], index: 6, kind: input, shape index: {}]
  %s7 = inlined_call_operand.vmem [shape: f32[16,1], index: 7, kind: input, shape index: {}]
  %s8 = inlined_call_operand.vmem [shape: f32[16,16], index: 8, kind: input, shape index: {}]
  %s9 = inlined_call_operand.vmem [shape: f32[16,1], index: 9, kind: input, shape index: {}]
  %s10 = inlined_call_operand.vmem [shape: f32[16,16], index: 10, kind: input, shape index: {}]
  %s11 = inlined_call_operand.vmem [shape: f32[16,1], index: 11, kind: input, shape index: {}]
  %s12 = inlined_call_operand.vmem [shape: f32[16,8], index: 12, kind: input, shape index: {}]
  %s13 = inlined_call_operand.vmem [shape: f32[16,1], index: 13, kind: input, shape index: {}]
  %s14 = inlined_call_operand.hbm [shape: f32[2,8,288], index: 14, kind: output, shape index: {0}]
  %s15 = inlined_call_operand.hbm [shape: f32[2,8,288], index: 15, kind: output, shape index: {1}]
  %s16 = inlined_call_operand.hbm [shape: f32[2,8,288], index: 16, kind: output, shape index: {2}]
  %17 = xla_tuple %s14, %s15, %s16
  %s18 = sld [smem:[#allocation0]]
  $region109: #{tpu_custom_call.1} parent=0
    _
  %s20 = ssub.s32 1, %s18
  %s21 = scalar_select 0, %s20, %s18
  $region1: #{tpu_custom_call.1} parent=0
    #allocation2 [shape = 'u8[4096]{0}', space=vmem, size = 0x1000, scoped, tag = 'input window, operand 2, single buffered']
    #allocation3 [shape = 's32[2]{0}', space=sflag, size = 0x8, scoped, tag = 'scoped memory for tpu_custom_call.1']
    #allocation4 [shape = 's32[2]{0}', space=sflag, size = 0x8, scoped, tag = 'scoped memory for tpu_custom_call.1']
    #allocation5 [shape = 'u8[24576]{0}', space=vmem, size = 0x6000, scoped, tag = 'output window, operand 0']
    #allocation6 [shape = 'u8[24576]{0}', space=vmem, size = 0x6000, scoped, tag = 'output window, operand 1']
    #allocation7 [shape = 's32[2]{0}', space=sflag, size = 0x8, scoped, tag = 'scoped memory for tpu_custom_call.1']
    #allocation8 [shape = 'u8[24576]{0}', space=vmem, size = 0x6000, scoped, tag = 'output window, operand 2']
    %22 = vsyncpa [#allocation3], 0
    %23 = vsyncpa [#allocation4], 0
    %s24 = scalar_lea.sflag [#allocation4], 1
    %25 = vsyncpa %s24, 0
    %26 = vsyncpa [#allocation7], 0
    %s27 = scalar_lea.sflag [#allocation7], 1
    %28 = vsyncpa %s27, 0
    loop: start=0, step=1, limit=4
    $region2: #{tpu_custom_call.1} parent=1 // loop_pre_header
      _
    $region3: #{tpu_custom_call.1} parent=1 // loop_header
      %s30 = sphi 0, %s34
      %p31 = scmp.ge.s32.totalorder %s30, 4
      %s40 = sphi 0, %s42
      %s43 = sphi 0, %s40
      %s44 = sphi 0, %s43
      %s60 = sphi 0, %s44
      %s66 = sphi 0, %s68
      %s69 = sphi 0, %s66
      %s70 = sphi 0, %s69
      %s86 = sphi 0, %s70
      %s90 = sphi 0, %s90
      %s92 = sphi 0, %s90
      %s93 = sphi 0, %s92
      %s107 = sphi 0, %s93
      %s111 = sphi 0, %s111
      %s113 = sphi 0, %s111
      %s114 = sphi 0, %s113
      %s128 = sphi 0, %s114
      %s132 = sphi 0, %s132
      %s134 = sphi 0, %s132
      %s135 = sphi 0, %s134
      %s149 = sphi 0, %s135
      %s153 = sphi 0, %s153
      %s155 = sphi 0, %s153
      %s156 = sphi 0, %s155
      %s170 = sphi 0, %s156
      %s174 = sphi 0, %s174
      %s176 = sphi 0, %s174
      %s177 = sphi 0, %s176
      %s191 = sphi 0, %s177
      %s195 = sphi 0, %s195
      %s197 = sphi 0, %s195
      %s198 = sphi 0, %s197
      %s212 = sphi 0, %s198
      %s216 = sphi 0, %s216
      %s218 = sphi 0, %s216
      %s219 = sphi 0, %s218
      %s233 = sphi 0, %s219
      %s237 = sphi 0, %s237
      %s239 = sphi 0, %s237
      %s240 = sphi 0, %s239
      %s254 = sphi 0, %s240
      %s258 = sphi 0, %s258
      %s260 = sphi 0, %s258
      %s261 = sphi 0, %s260
      %s275 = sphi 0, %s261
      %s279 = sphi 0, %s279
      %s281 = sphi 0, %s279
      %s282 = sphi 0, %s281
      %s296 = sphi 0, %s282
      %s300 = sphi 0, %s300
      %s302 = sphi 0, %s300
      %s303 = sphi 0, %s302
      %s317 = sphi 0, %s303
      %s321 = sphi 0, %s321
      %s323 = sphi 0, %s321
      %s324 = sphi 0, %s323
      %s338 = sphi 0, %s324
      %s344 = sphi 0, %s346
      %s347 = sphi 0, %s344
      %s348 = sphi 0, %s347
      %s364 = sphi 0, %s348
      %s370 = sphi 0, %s372
      %s373 = sphi 0, %s370
      %s374 = sphi 0, %s373
      %s390 = sphi 0, %s374
      %s396 = sphi 0, %s398
      %s399 = sphi 0, %s396
      %s400 = sphi 0, %s399
      %s416 = sphi 0, %s400
    $region4: #{tpu_custom_call.1} parent=1 // loop_header_branch
      %33 = sbr.rel (%p31) target = $region8
    $region5: #{tpu_custom_call.1} parent=1 // loop_body
      %s35 = ssub.s32 %s30, 1
      %s36 = ssub.s32 %s30, 2
      %s37 = sadd.s32 %s30, 1
      %s38 = ssub.s32 %s30, %s37
      %p39 = scmp.eq.s32.totalorder %s38, 0
      %s41 = sadd.s32 %s40, 1
      %s42 = scalar_select %p39, %s40, %s41
      %p45 = pneg %p39
      %p46 = scmp.eq.s32.totalorder %s30, 1
      %p47 = por %p45, %p46
      %p48 = scmp.ne.s32.totalorder %s40, %s43
      %p49 = scmp.eq.s32.totalorder %s30, 0
      %p50 = por %p48, %p49
      %p51 = scmp.ne.s32.totalorder %s40, %s43
      %p52 = scmp.eq.s32.totalorder %s35, 1
      %p53 = por %p51, %p52
      %p54 = scmp.ne.s32.totalorder %s43, %s44
      %p55 = scmp.eq.s32.totalorder %s35, 0
      %p56 = por %p54, %p55
      %p57 = scmp.ne.s32.totalorder %s43, %s44
      %p58 = scmp.eq.s32.totalorder %s36, 1
      %p59 = por %p57, %p58
      %p61 = scmp.ne.s32.totalorder %s44, %s60
      %p62 = scmp.eq.s32.totalorder %s36, 0
      %p63 = por %p61, %p62
      %s64 = ssub.s32 %s30, %s37
      %p65 = scmp.eq.s32.totalorder %s64, 0
      %s67 = sadd.s32 %s66, 1
      %s68 = scalar_select %p65, %s66, %s67
      %p71 = pneg %p65
      %p72 = scmp.eq.s32.totalorder %s30, 1
      %p73 = por %p71, %p72
      %p74 = scmp.ne.s32.totalorder %s66, %s69
      %p75 = scmp.eq.s32.totalorder %s30, 0
      %p76 = por %p74, %p75
      %p77 = scmp.ne.s32.totalorder %s66, %s69
      %p78 = scmp.eq.s32.totalorder %s35, 1
      %p79 = por %p77, %p78
      %p80 = scmp.ne.s32.totalorder %s69, %s70
      %p81 = scmp.eq.s32.totalorder %s35, 0
      %p82 = por %p80, %p81
      %p83 = scmp.ne.s32.totalorder %s69, %s70
      %p84 = scmp.eq.s32.totalorder %s36, 1
      %p85 = por %p83, %p84
      %p87 = scmp.ne.s32.totalorder %s70, %s86
      %p88 = scmp.eq.s32.totalorder %s36, 0
      %p89 = por %p87, %p88
      %s91 = sadd.s32 %s90, 1
      %p94 = scmp.eq.s32.totalorder %s30, 1
      %p95 = scmp.ne.s32.totalorder %s90, %s92
      %p96 = scmp.eq.s32.totalorder %s30, 0
      %p97 = por %p95, %p96
      %p98 = scmp.ne.s32.totalorder %s90, %s92
      %p99 = scmp.eq.s32.totalorder %s35, 1
      %p100 = por %p98, %p99
      %p101 = scmp.ne.s32.totalorder %s92, %s93
      %p102 = scmp.eq.s32.totalorder %s35, 0
      %p103 = por %p101, %p102
      %p104 = scmp.ne.s32.totalorder %s92, %s93
      %p105 = scmp.eq.s32.totalorder %s36, 1
      %p106 = por %p104, %p105
      %p108 = scmp.ne.s32.totalorder %s93, %s107
      %p109 = scmp.eq.s32.totalorder %s36, 0
      %p110 = por %p108, %p109
      %s112 = sadd.s32 %s111, 1
      %p115 = scmp.eq.s32.totalorder %s30, 1
      %p116 = scmp.ne.s32.totalorder %s111, %s113
      %p117 = scmp.eq.s32.totalorder %s30, 0
      %p118 = por %p116, %p117
      %p119 = scmp.ne.s32.totalorder %s111, %s113
      %p120 = scmp.eq.s32.totalorder %s35, 1
      %p121 = por %p119, %p120
      %p122 = scmp.ne.s32.totalorder %s113, %s114
      %p123 = scmp.eq.s32.totalorder %s35, 0
      %p124 = por %p122, %p123
      %p125 = scmp.ne.s32.totalorder %s113, %s114
      %p126 = scmp.eq.s32.totalorder %s36, 1
      %p127 = por %p125, %p126
      %p129 = scmp.ne.s32.totalorder %s114, %s128
      %p130 = scmp.eq.s32.totalorder %s36, 0
      %p131 = por %p129, %p130
      %s133 = sadd.s32 %s132, 1
      %p136 = scmp.eq.s32.totalorder %s30, 1
      %p137 = scmp.ne.s32.totalorder %s132, %s134
      %p138 = scmp.eq.s32.totalorder %s30, 0
      %p139 = por %p137, %p138
      %p140 = scmp.ne.s32.totalorder %s132, %s134
      %p141 = scmp.eq.s32.totalorder %s35, 1
      %p142 = por %p140, %p141
      %p143 = scmp.ne.s32.totalorder %s134, %s135
      %p144 = scmp.eq.s32.totalorder %s35, 0
      %p145 = por %p143, %p144
      %p146 = scmp.ne.s32.totalorder %s134, %s135
      %p147 = scmp.eq.s32.totalorder %s36, 1
      %p148 = por %p146, %p147
      %p150 = scmp.ne.s32.totalorder %s135, %s149
      %p151 = scmp.eq.s32.totalorder %s36, 0
      %p152 = por %p150, %p151
      %s154 = sadd.s32 %s153, 1
      %p157 = scmp.eq.s32.totalorder %s30, 1
      %p158 = scmp.ne.s32.totalorder %s153, %s155
      %p159 = scmp.eq.s32.totalorder %s30, 0
      %p160 = por %p158, %p159
      %p161 = scmp.ne.s32.totalorder %s153, %s155
      %p162 = scmp.eq.s32.totalorder %s35, 1
      %p163 = por %p161, %p162
      %p164 = scmp.ne.s32.totalorder %s155, %s156
      %p165 = scmp.eq.s32.totalorder %s35, 0
      %p166 = por %p164, %p165
      %p167 = scmp.ne.s32.totalorder %s155, %s156
      %p168 = scmp.eq.s32.totalorder %s36, 1
      %p169 = por %p167, %p168
      %p171 = scmp.ne.s32.totalorder %s156, %s170
      %p172 = scmp.eq.s32.totalorder %s36, 0
      %p173 = por %p171, %p172
      %s175 = sadd.s32 %s174, 1
      %p178 = scmp.eq.s32.totalorder %s30, 1
      %p179 = scmp.ne.s32.totalorder %s174, %s176
      %p180 = scmp.eq.s32.totalorder %s30, 0
      %p181 = por %p179, %p180
      %p182 = scmp.ne.s32.totalorder %s174, %s176
      %p183 = scmp.eq.s32.totalorder %s35, 1
      %p184 = por %p182, %p183
      %p185 = scmp.ne.s32.totalorder %s176, %s177
      %p186 = scmp.eq.s32.totalorder %s35, 0
      %p187 = por %p185, %p186
      %p188 = scmp.ne.s32.totalorder %s176, %s177
      %p189 = scmp.eq.s32.totalorder %s36, 1
      %p190 = por %p188, %p189
      %p192 = scmp.ne.s32.totalorder %s177, %s191
      %p193 = scmp.eq.s32.totalorder %s36, 0
      %p194 = por %p192, %p193
      %s196 = sadd.s32 %s195, 1
      %p199 = scmp.eq.s32.totalorder %s30, 1
      %p200 = scmp.ne.s32.totalorder %s195, %s197
      %p201 = scmp.eq.s32.totalorder %s30, 0
      %p202 = por %p200, %p201
      %p203 = scmp.ne.s32.totalorder %s195, %s197
      %p204 = scmp.eq.s32.totalorder %s35, 1
      %p205 = por %p203, %p204
      %p206 = scmp.ne.s32.totalorder %s197, %s198
      %p207 = scmp.eq.s32.totalorder %s35, 0
      %p208 = por %p206, %p207
      %p209 = scmp.ne.s32.totalorder %s197, %s198
      %p210 = scmp.eq.s32.totalorder %s36, 1
      %p211 = por %p209, %p210
      %p213 = scmp.ne.s32.totalorder %s198, %s212
      %p214 = scmp.eq.s32.totalorder %s36, 0
      %p215 = por %p213, %p214
      %s217 = sadd.s32 %s216, 1
      %p220 = scmp.eq.s32.totalorder %s30, 1
      %p221 = scmp.ne.s32.totalorder %s216, %s218
      %p222 = scmp.eq.s32.totalorder %s30, 0
      %p223 = por %p221, %p222
      %p224 = scmp.ne.s32.totalorder %s216, %s218
      %p225 = scmp.eq.s32.totalorder %s35, 1
      %p226 = por %p224, %p225
      %p227 = scmp.ne.s32.totalorder %s218, %s219
      %p228 = scmp.eq.s32.totalorder %s35, 0
      %p229 = por %p227, %p228
      %p230 = scmp.ne.s32.totalorder %s218, %s219
      %p231 = scmp.eq.s32.totalorder %s36, 1
      %p232 = por %p230, %p231
      %p234 = scmp.ne.s32.totalorder %s219, %s233
      %p235 = scmp.eq.s32.totalorder %s36, 0
      %p236 = por %p234, %p235
      %s238 = sadd.s32 %s237, 1
      %p241 = scmp.eq.s32.totalorder %s30, 1
      %p242 = scmp.ne.s32.totalorder %s237, %s239
      %p243 = scmp.eq.s32.totalorder %s30, 0
      %p244 = por %p242, %p243
      %p245 = scmp.ne.s32.totalorder %s237, %s239
      %p246 = scmp.eq.s32.totalorder %s35, 1
      %p247 = por %p245, %p246
      %p248 = scmp.ne.s32.totalorder %s239, %s240
      %p249 = scmp.eq.s32.totalorder %s35, 0
      %p250 = por %p248, %p249
      %p251 = scmp.ne.s32.totalorder %s239, %s240
      %p252 = scmp.eq.s32.totalorder %s36, 1
      %p253 = por %p251, %p252
      %p255 = scmp.ne.s32.totalorder %s240, %s254
      %p256 = scmp.eq.s32.totalorder %s36, 0
      %p257 = por %p255, %p256
      %s259 = sadd.s32 %s258, 1
      %p262 = scmp.eq.s32.totalorder %s30, 1
      %p263 = scmp.ne.s32.totalorder %s258, %s260
      %p264 = scmp.eq.s32.totalorder %s30, 0
      %p265 = por %p263, %p264
      %p266 = scmp.ne.s32.totalorder %s258, %s260
      %p267 = scmp.eq.s32.totalorder %s35, 1
      %p268 = por %p266, %p267
      %p269 = scmp.ne.s32.totalorder %s260, %s261
      %p270 = scmp.eq.s32.totalorder %s35, 0
      %p271 = por %p269, %p270
      %p272 = scmp.ne.s32.totalorder %s260, %s261
      %p273 = scmp.eq.s32.totalorder %s36, 1
      %p274 = por %p272, %p273
      %p276 = scmp.ne.s32.totalorder %s261, %s275
      %p277 = scmp.eq.s32.totalorder %s36, 0
      %p278 = por %p276, %p277
      %s280 = sadd.s32 %s279, 1
      %p283 = scmp.eq.s32.totalorder %s30, 1
      %p284 = scmp.ne.s32.totalorder %s279, %s281
      %p285 = scmp.eq.s32.totalorder %s30, 0
      %p286 = por %p284, %p285
      %p287 = scmp.ne.s32.totalorder %s279, %s281
      %p288 = scmp.eq.s32.totalorder %s35, 1
      %p289 = por %p287, %p288
      %p290 = scmp.ne.s32.totalorder %s281, %s282
      %p291 = scmp.eq.s32.totalorder %s35, 0
      %p292 = por %p290, %p291
      %p293 = scmp.ne.s32.totalorder %s281, %s282
      %p294 = scmp.eq.s32.totalorder %s36, 1
      %p295 = por %p293, %p294
      %p297 = scmp.ne.s32.totalorder %s282, %s296
      %p298 = scmp.eq.s32.totalorder %s36, 0
      %p299 = por %p297, %p298
      %s301 = sadd.s32 %s300, 1
      %p304 = scmp.eq.s32.totalorder %s30, 1
      %p305 = scmp.ne.s32.totalorder %s300, %s302
      %p306 = scmp.eq.s32.totalorder %s30, 0
      %p307 = por %p305, %p306
      %p308 = scmp.ne.s32.totalorder %s300, %s302
      %p309 = scmp.eq.s32.totalorder %s35, 1
      %p310 = por %p308, %p309
      %p311 = scmp.ne.s32.totalorder %s302, %s303
      %p312 = scmp.eq.s32.totalorder %s35, 0
      %p313 = por %p311, %p312
      %p314 = scmp.ne.s32.totalorder %s302, %s303
      %p315 = scmp.eq.s32.totalorder %s36, 1
      %p316 = por %p314, %p315
      %p318 = scmp.ne.s32.totalorder %s303, %s317
      %p319 = scmp.eq.s32.totalorder %s36, 0
      %p320 = por %p318, %p319
      %s322 = sadd.s32 %s321, 1
      %p325 = scmp.eq.s32.totalorder %s30, 1
      %p326 = scmp.ne.s32.totalorder %s321, %s323
      %p327 = scmp.eq.s32.totalorder %s30, 0
      %p328 = por %p326, %p327
      %p329 = scmp.ne.s32.totalorder %s321, %s323
      %p330 = scmp.eq.s32.totalorder %s35, 1
      %p331 = por %p329, %p330
      %p332 = scmp.ne.s32.totalorder %s323, %s324
      %p333 = scmp.eq.s32.totalorder %s35, 0
      %p334 = por %p332, %p333
      %p335 = scmp.ne.s32.totalorder %s323, %s324
      %p336 = scmp.eq.s32.totalorder %s36, 1
      %p337 = por %p335, %p336
      %p339 = scmp.ne.s32.totalorder %s324, %s338
      %p340 = scmp.eq.s32.totalorder %s36, 0
      %p341 = por %p339, %p340
      %s342 = ssub.s32 %s30, %s37
      %p343 = scmp.eq.s32.totalorder %s342, 0
      %s345 = sadd.s32 %s344, 1
      %s346 = scalar_select %p343, %s344, %s345
      %p349 = pneg %p343
      %p350 = scmp.eq.s32.totalorder %s30, 1
      %p351 = por %p349, %p350
      %p352 = scmp.ne.s32.totalorder %s344, %s347
      %p353 = scmp.eq.s32.totalorder %s30, 0
      %p354 = por %p352, %p353
      %p355 = scmp.ne.s32.totalorder %s344, %s347
      %p356 = scmp.eq.s32.totalorder %s35, 1
      %p357 = por %p355, %p356
      %p358 = scmp.ne.s32.totalorder %s347, %s348
      %p359 = scmp.eq.s32.totalorder %s35, 0
      %p360 = por %p358, %p359
      %p361 = scmp.ne.s32.totalorder %s347, %s348
      %p362 = scmp.eq.s32.totalorder %s36, 1
      %p363 = por %p361, %p362
      %p365 = scmp.ne.s32.totalorder %s348, %s364
      %p366 = scmp.eq.s32.totalorder %s36, 0
      %p367 = por %p365, %p366
      %s368 = ssub.s32 %s30, %s37
      %p369 = scmp.eq.s32.totalorder %s368, 0
      %s371 = sadd.s32 %s370, 1
      %s372 = scalar_select %p369, %s370, %s371
      %p375 = pneg %p369
      %p376 = scmp.eq.s32.totalorder %s30, 1
      %p377 = por %p375, %p376
      %p378 = scmp.ne.s32.totalorder %s370, %s373
      %p379 = scmp.eq.s32.totalorder %s30, 0
      %p380 = por %p378, %p379
      %p381 = scmp.ne.s32.totalorder %s370, %s373
      %p382 = scmp.eq.s32.totalorder %s35, 1
      %p383 = por %p381, %p382
      %p384 = scmp.ne.s32.totalorder %s373, %s374
      %p385 = scmp.eq.s32.totalorder %s35, 0
      %p386 = por %p384, %p385
      %p387 = scmp.ne.s32.totalorder %s373, %s374
      %p388 = scmp.eq.s32.totalorder %s36, 1
      %p389 = por %p387, %p388
      %p391 = scmp.ne.s32.totalorder %s374, %s390
      %p392 = scmp.eq.s32.totalorder %s36, 0
      %p393 = por %p391, %p392
      %s394 = ssub.s32 %s30, %s37
      %p395 = scmp.eq.s32.totalorder %s394, 0
      %s397 = sadd.s32 %s396, 1
      %s398 = scalar_select %p395, %s396, %s397
      %p401 = pneg %p395
      %p402 = scmp.eq.s32.totalorder %s30, 1
      %p403 = por %p401, %p402
      %p404 = scmp.ne.s32.totalorder %s396, %s399
      %p405 = scmp.eq.s32.totalorder %s30, 0
      %p406 = por %p404, %p405
      %p407 = scmp.ne.s32.totalorder %s396, %s399
      %p408 = scmp.eq.s32.totalorder %s35, 1
      %p409 = por %p407, %p408
      %p410 = scmp.ne.s32.totalorder %s399, %s400
      %p411 = scmp.eq.s32.totalorder %s35, 0
      %p412 = por %p410, %p411
      %p413 = scmp.ne.s32.totalorder %s399, %s400
      %p414 = scmp.eq.s32.totalorder %s36, 1
      %p415 = por %p413, %p414
      %p417 = scmp.ne.s32.totalorder %s400, %s416
      %p418 = scmp.eq.s32.totalorder %s36, 0
      %p419 = por %p417, %p418
      %p420 = scmp.le.s32.totalorder 1, %s30
      %p421 = scmp.lt.s32.totalorder %s30, 3
      %p422 = pnand %p420, %p421
      %p423 = pneg %p422
      // Predicated region
      $region9: #{tpu_custom_call.1} parent=5 // pred_check
        _
      $region10: #{tpu_custom_call.1} parent=5 // pred_check_branch
        %425 = sbr.rel (%p422) target = $region12
      $region11: #{tpu_custom_call.1} parent=5 // pred_region
        %s426 = ssub.s32 %s30, 1
        // Predicated region
        $region13: #{tpu_custom_call.1} parent=11 // pred_check
          %p427 = pneg %p103
        $region14: #{tpu_custom_call.1} parent=11 // pred_check_branch
          %429 = sbr.rel (%p427) target = $region16
        $region15: #{tpu_custom_call.1} parent=11 // pred_region
          %s431 = ssub.s32 128, 128
          %432 = vsyncadd [#allocation3], %s431
          %s434 = sshll.u32 [#allocation2], 4
          %s435 = int_to_ptr.vmem [resolvable:$true] %s434
          %437 = dma.hbm_to_vmem [thread:$0]  %s2, 128, %s435, [#allocation3]
        $region16: #{tpu_custom_call.1} parent=11 // pred_fallthru
          _
        // Predicated region
        $region17: #{tpu_custom_call.1} parent=11 // pred_check
          %p438 = pneg %p124
        $region18: #{tpu_custom_call.1} parent=11 // pred_check_branch
          %440 = sbr.rel (%p438) target = $region20
        $region19: #{tpu_custom_call.1} parent=11 // pred_region
          _
        $region20: #{tpu_custom_call.1} parent=11 // pred_fallthru
          _
        // Predicated region
        $region21: #{tpu_custom_call.1} parent=11 // pred_check
          %p441 = pneg %p145
        $region22: #{tpu_custom_call.1} parent=11 // pred_check_branch
          %443 = sbr.rel (%p441) target = $region24
        $region23: #{tpu_custom_call.1} parent=11 // pred_region
          _
        $region24: #{tpu_custom_call.1} parent=11 // pred_fallthru
          _
        // Predicated region
        $region25: #{tpu_custom_call.1} parent=11 // pred_check
          %p444 = pneg %p166
        $region26: #{tpu_custom_call.1} parent=11 // pred_check_branch
          %446 = sbr.rel (%p444) target = $region28
        $region27: #{tpu_custom_call.1} parent=11 // pred_region
          _
        $region28: #{tpu_custom_call.1} parent=11 // pred_fallthru
          _
        // Predicated region
        $region29: #{tpu_custom_call.1} parent=11 // pred_check
          %p447 = pneg %p187
        $region30: #{tpu_custom_call.1} parent=11 // pred_check_branch
          %449 = sbr.rel (%p447) target = $region32
        $region31: #{tpu_custom_call.1} parent=11 // pred_region
          _
        $region32: #{tpu_custom_call.1} parent=11 // pred_fallthru
          _
        // Predicated region
        $region33: #{tpu_custom_call.1} parent=11 // pred_check
          %p450 = pneg %p208
        $region34: #{tpu_custom_call.1} parent=11 // pred_check_branch
          %452 = sbr.rel (%p450) target = $region36
        $region35: #{tpu_custom_call.1} parent=11 // pred_region
          _
        $region36: #{tpu_custom_call.1} parent=11 // pred_fallthru
          _
        // Predicated region
        $region37: #{tpu_custom_call.1} parent=11 // pred_check
          %p453 = pneg %p229
        $region38: #{tpu_custom_call.1} parent=11 // pred_check_branch
          %455 = sbr.rel (%p453) target = $region40
        $region39: #{tpu_custom_call.1} parent=11 // pred_region
          _
        $region40: #{tpu_custom_call.1} parent=11 // pred_fallthru
          _
        // Predicated region
        $region41: #{tpu_custom_call.1} parent=11 // pred_check
          %p456 = pneg %p250
        $region42: #{tpu_custom_call.1} parent=11 // pred_check_branch
          %458 = sbr.rel (%p456) target = $region44
        $region43: #{tpu_custom_call.1} parent=11 // pred_region
          _
        $region44: #{tpu_custom_call.1} parent=11 // pred_fallthru
          _
        // Predicated region
        $region45: #{tpu_custom_call.1} parent=11 // pred_check
          %p459 = pneg %p271
        $region46: #{tpu_custom_call.1} parent=11 // pred_check_branch
          %461 = sbr.rel (%p459) target = $region48
        $region47: #{tpu_custom_call.1} parent=11 // pred_region
          _
        $region48: #{tpu_custom_call.1} parent=11 // pred_fallthru
          _
        // Predicated region
        $region49: #{tpu_custom_call.1} parent=11 // pred_check
          %p462 = pneg %p292
        $region50: #{tpu_custom_call.1} parent=11 // pred_check_branch
          %464 = sbr.rel (%p462) target = $region52
        $region51: #{tpu_custom_call.1} parent=11 // pred_region
          _
        $region52: #{tpu_custom_call.1} parent=11 // pred_fallthru
          _
        // Predicated region
        $region53: #{tpu_custom_call.1} parent=11 // pred_check
          %p465 = pneg %p313
        $region54: #{tpu_custom_call.1} parent=11 // pred_check_branch
          %467 = sbr.rel (%p465) target = $region56
        $region55: #{tpu_custom_call.1} parent=11 // pred_region
          _
        $region56: #{tpu_custom_call.1} parent=11 // pred_fallthru
          _
        // Predicated region
        $region57: #{tpu_custom_call.1} parent=11 // pred_check
          %p468 = pneg %p334
        $region58: #{tpu_custom_call.1} parent=11 // pred_check_branch
          %470 = sbr.rel (%p468) target = $region60
        $region59: #{tpu_custom_call.1} parent=11 // pred_region
          _
        $region60: #{tpu_custom_call.1} parent=11 // pred_fallthru
          _
      $region12: #{tpu_custom_call.1} parent=5 // pred_fallthru
        _
      %p471 = scmp.lt.s32.totalorder %s30, 2
      // Predicated region
      $region61: #{tpu_custom_call.1} parent=5 // pred_check
        %p472 = pneg %p471
      $region62: #{tpu_custom_call.1} parent=5 // pred_check_branch
        %474 = sbr.rel (%p472) target = $region64
      $region63: #{tpu_custom_call.1} parent=5 // pred_region
        // Predicated region
        $region65: #{tpu_custom_call.1} parent=63 // pred_check
          %p475 = pneg %p50
        $region66: #{tpu_custom_call.1} parent=63 // pred_check_branch
          %477 = sbr.rel (%p475) target = $region68
        $region67: #{tpu_custom_call.1} parent=63 // pred_region
          %p478 = scmp.lt.s32.totalorder %s30, 1
          %s479 = scalar_select %p478, %s30, 1
          %s480 = smul.addr %s479, 3
          %s481 = smul.addr %s480, 8
          %s482 = scalar_lea.vmem %s0, %s481
        $region68: #{tpu_custom_call.1} parent=63 // pred_fallthru
          _
        // Predicated region
        $region69: #{tpu_custom_call.1} parent=63 // pred_check
          %p483 = pneg %p76
        $region70: #{tpu_custom_call.1} parent=63 // pred_check_branch
          %485 = sbr.rel (%p483) target = $region72
        $region71: #{tpu_custom_call.1} parent=63 // pred_region
          %p486 = scmp.lt.s32.totalorder %s30, 1
          %s487 = scalar_select %p486, %s30, 1
          %s488 = smul.addr %s487, 3
          %s489 = smul.addr %s488, 8
          %s490 = scalar_lea.vmem %s1, %s489
        $region72: #{tpu_custom_call.1} parent=63 // pred_fallthru
          _
      $region64: #{tpu_custom_call.1} parent=5 // pred_fallthru
        _
      %p491 = scmp.le.s32.totalorder 1, %s30
      %p492 = scmp.lt.s32.totalorder %s30, 3
      %p493 = pnand %p491, %p492
      %p494 = pneg %p493
      // Predicated region
      $region73: #{tpu_custom_call.1} parent=5 // pred_check
        _
      $region74: #{tpu_custom_call.1} parent=5 // pred_check_branch
        %496 = sbr.rel (%p493) target = $region76
      $region75: #{tpu_custom_call.1} parent=5 // pred_region
        %s497 = ssub.s32 %s30, 1
        // Predicated region
        $region77: #{tpu_custom_call.1} parent=75 // pred_check
          %p498 = pneg %p103
        $region78: #{tpu_custom_call.1} parent=75 // pred_check_branch
          %500 = sbr.rel (%p498) target = $region80
        $region79: #{tpu_custom_call.1} parent=75 // pred_region
          %501 = dma.done [#allocation3], 128
        $region80: #{tpu_custom_call.1} parent=75 // pred_fallthru
          _
        %p502 = scmp.lt.s32.totalorder %s35, 1
        %s503 = scalar_select %p502, %s35, 1
        %s504 = smul.addr %s503, 3
        %s505 = smul.addr %s504, 8
        %s506 = scalar_lea.vmem %s0, %s505
        %p507 = pneg %p56
        %p508 = pneg %p53
        %p509 = scmp.lt.s32.totalorder %s35, 1
        %s510 = scalar_select %p509, %s35, 1
        %s511 = smul.addr %s510, 3
        %s512 = smul.addr %s511, 8
        %s513 = scalar_lea.vmem %s1, %s512
        %p514 = pneg %p82
        %p515 = pneg %p79
        %p516 = pneg %p103
        %p517 = pneg %p100
        %p518 = pneg %p124
        %p519 = pneg %p121
        %p520 = pneg %p145
        %p521 = pneg %p142
        %p522 = pneg %p166
        %p523 = pneg %p163
        %p524 = pneg %p187
        %p525 = pneg %p184
        %p526 = pneg %p208
        %p527 = pneg %p205
        %p528 = pneg %p229
        %p529 = pneg %p226
        %p530 = pneg %p250
        %p531 = pneg %p247
        %p532 = pneg %p271
        %p533 = pneg %p268
        %p534 = pneg %p292
        %p535 = pneg %p289
        %p536 = pneg %p313
        %p537 = pneg %p310
        %p538 = pneg %p334
        %p539 = pneg %p331
        %p540 = pneg %p360
        %p541 = pneg %p357
        %s542 = sand.u32 %s347, 1
        %s543 = scalar_lea.sflag [#allocation4], %s542
        %s544 = sand.u32 %s347, 1
        %s545 = smul.addr %s544, 24
        %s546 = scalar_lea.vmem [#allocation5], %s545
        %p547 = pneg %p386
        %p548 = pneg %p383
        %s549 = sand.u32 %s35, 1
        %s550 = scalar_lea.sflag [#allocation7], %s549
        %s551 = sand.u32 %s373, 1
        %s552 = smul.addr %s551, 24
        %s553 = scalar_lea.vmem [#allocation6], %s552
        %p554 = pneg %p412
        %p555 = pneg %p409
        %s556 = sand.u32 %s35, 1
        %s557 = scalar_lea.sflag [#allocation7], %s556
        %s558 = sand.u32 %s399, 1
        %s559 = smul.addr %s558, 24
        %s560 = scalar_lea.vmem [#allocation8], %s559
        %p561 = scmp.lt.s32.totalorder %s35, 1
        %s562 = scalar_select %p561, %s35, 1
        %s563 = smul.addr %s562, 3
        %s564 = smul.addr %s563, 8
        %s565 = scalar_lea.vmem %s0, %s564
        %p566 = scmp.lt.s32.totalorder %s35, 1
        %s567 = scalar_select %p566, %s35, 1
        %s568 = smul.addr %s567, 3
        %s569 = smul.addr %s568, 8
        %s570 = scalar_lea.vmem %s1, %s569
        %v571 = vld [vmem:[%s565] sm:$0xff]
        %v572 = vld [vmem:[%s565 + $0x8] sm:$0xff]
        %v573 = vld [vmem:[%s565 + $0x10] sm:$0xff]
        %v574 = vld [vmem:[%s570] sm:$0xff]
        %v575 = vld [vmem:[%s570 + $0x8] sm:$0xff]
        %v576 = vld [vmem:[%s570 + $0x10] sm:$0xff]
        %580 = vrot.lane.b32.xlu0 %v571, 127
        %v581 = vpop.permute.xlu0 %580
        %582 = vrot.lane.b32.xlu0 %v572, 127
        %v583 = vpop.permute.xlu0 %582
        %584 = vrot.lane.b32.xlu0 %v573, 127
        %v585 = vpop.permute.xlu0 %584
        %vm586 = vcmask 1039360
        %v587 = vsel %vm586, %v581, %v583
        %v588 = vsel %vm586, %v583, %v585
        %592 = vrot.lane.b32.xlu0 %v571, 126
        %v593 = vpop.permute.xlu0 %592
        %594 = vrot.lane.b32.xlu0 %v572, 126
        %v595 = vpop.permute.xlu0 %594
        %596 = vrot.lane.b32.xlu0 %v573, 126
        %v597 = vpop.permute.xlu0 %596
        %vm598 = vcmask 1031168
        %v599 = vsel %vm598, %v593, %v595
        %v600 = vsel %vm598, %v595, %v597
        %v604 = vld [vmem:[#allocation2] sm:$0xff]
        %v605 = vld [vmem:[%s3] sm:$0xff]
        %607 = vset.pattern.permute.xlu0 0
        %608 = vperm.xlu0 %607, %v605
        %v609 = vpop.permute.xlu0 %608
        %vm611 = vcmask 195584
        %v613 = vsel %vm611, %v604, 0
        %615 = vmatprep.subr.mxu0 %v572
        %616 = vmatpush1.msra.mxu0 %v571
        %617 = vmatprep.subr.mxu0 %v588
        %618 = vmatpush1.msra.mxu0 %v587
        %619 = vmatprep.subr.mxu0 %v600
        %620 = vmatpush1.msra.mxu0 %v599
        %621 = vmatprep.subr.mxu0 0.0
        %622 = vmatpush1.msra.mxu0 0.0
        %623 = vmatprep.subr.mxu0 0.0
        %624 = vmatpush1.msra.mxu0 0.0
        %625 = vmatprep.subr.mxu0 0.0
        %626 = vmatpush1.msra.mxu0 0.0
        %627 = vmatprep.subr.mxu0 0.0
        %628 = vmatpush1.msra.mxu0 0.0
        %629 = vmatprep.subr.mxu0 0.0
        %630 = vmatpush1.msra.mxu0 0.0
        %631 = vmatprep.subr.mxu0 0.0
        %632 = vmatpush1.msra.mxu0 0.0
        %633 = vmatprep.subr.mxu0 0.0
        %634 = vmatpush1.msra.mxu0 0.0
        %635 = vmatprep.subr.mxu0 0.0
        %636 = vmatpush1.msra.mxu0 0.0
        %637 = vmatprep.subr.mxu0 0.0
        %638 = vmatpush1.msra.mxu0 0.0
        %639 = vmatprep.subr.mxu0 0.0
        %640 = vmatpush1.msra.mxu0 0.0
        %641 = vmatprep.subr.mxu0 0.0
        %642 = vmatpush1.msra.mxu0 0.0
        %643 = vmatprep.subr.mxu0 0.0
        %644 = vmatpush1.msra.mxu0 0.0
        %645 = vmatprep.subr.mxu0 0.0
        %646 = vmatpush1.msra.mxu0 0.0
        %647 = vmatprep.subr.mxu0 0.0
        %648 = vmatpush1.msra.mxu0 0.0
        %649 = vmatprep.subr.mxu0 0.0
        %650 = vmatpush1.msra.mxu0 0.0
        %651 = vmatprep.subr.mxu0 0.0
        %652 = vmatpush1.msra.mxu0 0.0
        %653 = vmatprep.subr.mxu0 0.0
        %654 = vmatpush1.msra.mxu0 0.0
        %655 = vmatprep.subr.mxu0 0.0
        %656 = vmatpush1.msra.mxu0 0.0
        %657 = vmatprep.subr.mxu0 0.0
        %658 = vmatpush1.msra.mxu0 0.0
        %659 = vmatprep.subr.mxu0 0.0
        %660 = vmatpush1.msra.mxu0 0.0
        %661 = vmatprep.subr.mxu0 0.0
        %662 = vmatpush1.msra.mxu0 0.0
        %663 = vmatprep.subr.mxu0 0.0
        %664 = vmatpush1.msra.mxu0 0.0
        %665 = vmatprep.subr.mxu0 0.0
        %666 = vmatpush1.msra.mxu0 0.0
        %667 = vmatprep.subr.mxu0 0.0
        %668 = vmatpush1.msra.mxu0 0.0
        %669 = vmatprep.subr.mxu0 0.0
        %670 = vmatpush1.msra.mxu0 0.0
        %671 = vmatprep.subr.mxu0 0.0
        %672 = vmatpush1.msra.mxu0 0.0
        %673 = vmatprep.subr.mxu0 0.0
        %674 = vmatpush1.msra.mxu0 0.0
        %675 = vmatprep.subr.mxu0 0.0
        %676 = vmatpush1.msra.mxu0 0.0
        %677 = vmatprep.subr.mxu0 0.0
        %678 = vmatpush1.msra.mxu0 0.0
        %679 = vmatprep.mubr.f32.mxu0 0.0
        %680 = vmatmul.mubr.f32.gmra.mrb[0].mxu0 %v613
        %v681 = vpop.f32.mrb[0].mxu0
        %v682 = vadd.f32 %v609, %v681
        %v683 = vpop.f32.mrb[0].mxu0
        %v684 = vadd.f32 %v609, %v683
        %685 = vdwg.mxu0
        %686 = vmatprep.subr.mxu0 0.0
        %687 = vmatpush1.msra.mxu0 %v573
        %688 = vmatprep.subr.mxu0 0.0
        %689 = vmatpush1.msra.mxu0 %v585
        %690 = vmatprep.subr.mxu0 0.0
        %691 = vmatpush1.msra.mxu0 %v597
        %692 = vmatprep.subr.mxu0 0.0
        %693 = vmatpush1.msra.mxu0 0.0
        %694 = vmatprep.subr.mxu0 0.0
        %695 = vmatpush1.msra.mxu0 0.0
        %696 = vmatprep.subr.mxu0 0.0
        %697 = vmatpush1.msra.mxu0 0.0
        %698 = vmatprep.subr.mxu0 0.0
        %699 = vmatpush1.msra.mxu0 0.0
        %700 = vmatprep.subr.mxu0 0.0
        %701 = vmatpush1.msra.mxu0 0.0
        %702 = vmatprep.subr.mxu0 0.0
        %703 = vmatpush1.msra.mxu0 0.0
        %704 = vmatprep.subr.mxu0 0.0
        %705 = vmatpush1.msra.mxu0 0.0
        %706 = vmatprep.subr.mxu0 0.0
        %707 = vmatpush1.msra.mxu0 0.0
        %708 = vmatprep.subr.mxu0 0.0
        %709 = vmatpush1.msra.mxu0 0.0
        %710 = vmatprep.subr.mxu0 0.0
        %711 = vmatpush1.msra.mxu0 0.0
        %712 = vmatprep.subr.mxu0 0.0
        %713 = vmatpush1.msra.mxu0 0.0
        %714 = vmatprep.subr.mxu0 0.0
        %715 = vmatpush1.msra.mxu0 0.0
        %716 = vmatprep.subr.mxu0 0.0
        %717 = vmatpush1.msra.mxu0 0.0
        %718 = vmatprep.subr.mxu0 0.0
        %719 = vmatpush1.msra.mxu0 0.0
        %720 = vmatprep.subr.mxu0 0.0
        %721 = vmatpush1.msra.mxu0 0.0
        %722 = vmatprep.subr.mxu0 0.0
        %723 = vmatpush1.msra.mxu0 0.0
        %724 = vmatprep.subr.mxu0 0.0
        %725 = vmatpush1.msra.mxu0 0.0
        %726 = vmatprep.subr.mxu0 0.0
        %727 = vmatpush1.msra.mxu0 0.0
        %728 = vmatprep.subr.mxu0 0.0
        %729 = vmatpush1.msra.mxu0 0.0
        %730 = vmatprep.subr.mxu0 0.0
        %731 = vmatpush1.msra.mxu0 0.0
        %732 = vmatprep.subr.mxu0 0.0
        %733 = vmatpush1.msra.mxu0 0.0
        %734 = vmatprep.subr.mxu0 0.0
        %735 = vmatpush1.msra.mxu0 0.0
        %736 = vmatprep.subr.mxu0 0.0
        %737 = vmatpush1.msra.mxu0 0.0
        %738 = vmatprep.subr.mxu0 0.0
        %739 = vmatpush1.msra.mxu0 0.0
        %740 = vmatprep.subr.mxu0 0.0
        %741 = vmatpush1.msra.mxu0 0.0
        %742 = vmatprep.subr.mxu0 0.0
        %743 = vmatpush1.msra.mxu0 0.0
        %744 = vmatprep.subr.mxu0 0.0
        %745 = vmatpush1.msra.mxu0 0.0
        %746 = vmatprep.subr.mxu0 0.0
        %747 = vmatpush1.msra.mxu0 0.0
        %748 = vmatprep.subr.mxu0 0.0
        %749 = vmatpush1.msra.mxu0 0.0
        %750 = vmatprep.mubr.f32.mxu0 0.0
        %751 = vmatmul.mubr.f32.gmra.mrb[0].mxu0 %v613
        %v752 = vpop.f32.mrb[0].mxu0
        %v753 = vadd.f32 %v609, %v752
        %v754 = vpop.f32.mrb[0].mxu0
        %755 = vdwg.mxu0
        %v756 = vlaneseq
        %v757 = vand.u32 %v756, 127
        %v758 = vadd.s32 %v757, 128
        %v759 = vadd.s32 %v757, 256
        %vm760 = vcmp.ge.s32.totalorder %v757, 36
        %vm761 = vcmp.ge.s32.totalorder %v758, 36
        %vm762 = vcmp.ge.s32.totalorder %v759, 36
        %v763 = vsel %vm760, %v682, 0.0
        %v764 = vsel %vm761, %v684, 0.0
        %v765 = vsel %vm762, %v753, 0.0
        %769 = vrot.lane.b32.xlu0 %v763, 110
        %v770 = vpop.permute.xlu0 %769
        %771 = vrot.lane.b32.xlu0 %v764, 110
        %v772 = vpop.permute.xlu0 %771
        %773 = vrot.lane.b32.xlu0 %v765, 110
        %v774 = vpop.permute.xlu0 %773
        %vm775 = vcmask 900096
        %v776 = vsel %vm775, %v770, %v772
        %v777 = vsel %vm775, %v772, %v774
        %v781 = vld [vmem:[%s4] sm:$0xff]
        %v782 = vld [vmem:[%s4 + $0x8] sm:$0xff]
        %v783 = vld [vmem:[%s5] sm:$0xff]
        %v784 = vld [vmem:[%s5 + $0x8] sm:$0xff]
        %786 = vset.pattern.permute.xlu0 0
        %787 = vperm.xlu0 %786, %v783
        %v788 = vpop.permute.xlu0 %787
        %791 = vset.pattern.permute.xlu0 0
        %792 = vperm.xlu0 %791, %v784
        %v793 = vpop.permute.xlu0 %792
        %vm795 = vcmask 130048
        %v797 = vsel %vm795, %v781, 0
        %v800 = vsel %vm795, %v782, 0
        %802 = vmatprep.subr.mxu0 %v764
        %803 = vmatpush1.msra.mxu0 %v763
        %804 = vmatprep.subr.mxu0 %v777
        %805 = vmatpush1.msra.mxu0 %v776
        %806 = vmatprep.subr.mxu0 0.0
        %807 = vmatpush1.msra.mxu0 0.0
        %808 = vmatprep.subr.mxu0 0.0
        %809 = vmatpush1.msra.mxu0 0.0
        %810 = vmatprep.subr.mxu0 0.0
        %811 = vmatpush1.msra.mxu0 0.0
        %812 = vmatprep.subr.mxu0 0.0
        %813 = vmatpush1.msra.mxu0 0.0
        %814 = vmatprep.subr.mxu0 0.0
        %815 = vmatpush1.msra.mxu0 0.0
        %816 = vmatprep.subr.mxu0 0.0
        %817 = vmatpush1.msra.mxu0 0.0
        %818 = vmatprep.subr.mxu0 0.0
        %819 = vmatpush1.msra.mxu0 0.0
        %820 = vmatprep.subr.mxu0 0.0
        %821 = vmatpush1.msra.mxu0 0.0
        %822 = vmatprep.subr.mxu0 0.0
        %823 = vmatpush1.msra.mxu0 0.0
        %824 = vmatprep.subr.mxu0 0.0
        %825 = vmatpush1.msra.mxu0 0.0
        %826 = vmatprep.subr.mxu0 0.0
        %827 = vmatpush1.msra.mxu0 0.0
        %828 = vmatprep.subr.mxu0 0.0
        %829 = vmatpush1.msra.mxu0 0.0
        %830 = vmatprep.subr.mxu0 0.0
        %831 = vmatpush1.msra.mxu0 0.0
        %832 = vmatprep.subr.mxu0 0.0
        %833 = vmatpush1.msra.mxu0 0.0
        %834 = vmatprep.subr.mxu0 0.0
        %835 = vmatpush1.msra.mxu0 0.0
        %836 = vmatprep.subr.mxu0 0.0
        %837 = vmatpush1.msra.mxu0 0.0
        %838 = vmatprep.subr.mxu0 0.0
        %839 = vmatpush1.msra.mxu0 0.0
        %840 = vmatprep.subr.mxu0 0.0
        %841 = vmatpush1.msra.mxu0 0.0
        %842 = vmatprep.subr.mxu0 0.0
        %843 = vmatpush1.msra.mxu0 0.0
        %844 = vmatprep.subr.mxu0 0.0
        %845 = vmatpush1.msra.mxu0 0.0
        %846 = vmatprep.subr.mxu0 0.0
        %847 = vmatpush1.msra.mxu0 0.0
        %848 = vmatprep.subr.mxu0 0.0
        %849 = vmatpush1.msra.mxu0 0.0
        %850 = vmatprep.subr.mxu0 0.0
        %851 = vmatpush1.msra.mxu0 0.0
        %852 = vmatprep.subr.mxu0 0.0
        %853 = vmatpush1.msra.mxu0 0.0
        %854 = vmatprep.subr.mxu0 0.0
        %855 = vmatpush1.msra.mxu0 0.0
        %856 = vmatprep.subr.mxu0 0.0
        %857 = vmatpush1.msra.mxu0 0.0
        %858 = vmatprep.subr.mxu0 0.0
        %859 = vmatpush1.msra.mxu0 0.0
        %860 = vmatprep.subr.mxu0 0.0
        %861 = vmatpush1.msra.mxu0 0.0
        %862 = vmatprep.subr.mxu0 0.0
        %863 = vmatpush1.msra.mxu0 0.0
        %864 = vmatprep.subr.mxu0 0.0
        %865 = vmatpush1.msra.mxu0 0.0
        %866 = vmatprep.mubr.f32.mxu0 0.0
        %867 = vmatmul.mubr.f32.gmra.mrb[0].mxu0 %v797
        %v868 = vpop.f32.mrb[0].mxu0
        %v869 = vadd.f32 %v788, %v868
        %v870 = vpop.f32.mrb[0].mxu0
        %v871 = vadd.f32 %v788, %v870
        %872 = vmatprep.mubr.f32.mxu0 0.0
        %873 = vmatmul.mubr.f32.gmra.mrb[0].mxu0 %v800
        %v874 = vpop.f32.mrb[0].mxu0
        %v875 = vadd.f32 %v793, %v874
        %v876 = vpop.f32.mrb[0].mxu0
        %v877 = vadd.f32 %v793, %v876
        %878 = vdwg.mxu0
        %879 = vmatprep.subr.mxu0 0.0
        %880 = vmatpush1.msra.mxu0 %v765
        %881 = vmatprep.subr.mxu0 0.0
        %882 = vmatpush1.msra.mxu0 %v774
        %883 = vmatprep.subr.mxu0 0.0
        %884 = vmatpush1.msra.mxu0 0.0
        %885 = vmatprep.subr.mxu0 0.0
        %886 = vmatpush1.msra.mxu0 0.0
        %887 = vmatprep.subr.mxu0 0.0
        %888 = vmatpush1.msra.mxu0 0.0
        %889 = vmatprep.subr.mxu0 0.0
        %890 = vmatpush1.msra.mxu0 0.0
        %891 = vmatprep.subr.mxu0 0.0
        %892 = vmatpush1.msra.mxu0 0.0
        %893 = vmatprep.subr.mxu0 0.0
        %894 = vmatpush1.msra.mxu0 0.0
        %895 = vmatprep.subr.mxu0 0.0
        %896 = vmatpush1.msra.mxu0 0.0
        %897 = vmatprep.subr.mxu0 0.0
        %898 = vmatpush1.msra.mxu0 0.0
        %899 = vmatprep.subr.mxu0 0.0
        %900 = vmatpush1.msra.mxu0 0.0
        %901 = vmatprep.subr.mxu0 0.0
        %902 = vmatpush1.msra.mxu0 0.0
        %903 = vmatprep.subr.mxu0 0.0
        %904 = vmatpush1.msra.mxu0 0.0
        %905 = vmatprep.subr.mxu0 0.0
        %906 = vmatpush1.msra.mxu0 0.0
        %907 = vmatprep.subr.mxu0 0.0
        %908 = vmatpush1.msra.mxu0 0.0
        %909 = vmatprep.subr.mxu0 0.0
        %910 = vmatpush1.msra.mxu0 0.0
        %911 = vmatprep.subr.mxu0 0.0
        %912 = vmatpush1.msra.mxu0 0.0
        %913 = vmatprep.subr.mxu0 0.0
        %914 = vmatpush1.msra.mxu0 0.0
        %915 = vmatprep.subr.mxu0 0.0
        %916 = vmatpush1.msra.mxu0 0.0
        %917 = vmatprep.subr.mxu0 0.0
        %918 = vmatpush1.msra.mxu0 0.0
        %919 = vmatprep.subr.mxu0 0.0
        %920 = vmatpush1.msra.mxu0 0.0
        %921 = vmatprep.subr.mxu0 0.0
        %922 = vmatpush1.msra.mxu0 0.0
        %923 = vmatprep.subr.mxu0 0.0
        %924 = vmatpush1.msra.mxu0 0.0
        %925 = vmatprep.subr.mxu0 0.0
        %926 = vmatpush1.msra.mxu0 0.0
        %927 = vmatprep.subr.mxu0 0.0
        %928 = vmatpush1.msra.mxu0 0.0
        %929 = vmatprep.subr.mxu0 0.0
        %930 = vmatpush1.msra.mxu0 0.0
        %931 = vmatprep.subr.mxu0 0.0
        %932 = vmatpush1.msra.mxu0 0.0
        %933 = vmatprep.subr.mxu0 0.0
        %934 = vmatpush1.msra.mxu0 0.0
        %935 = vmatprep.subr.mxu0 0.0
        %936 = vmatpush1.msra.mxu0 0.0
        %937 = vmatprep.subr.mxu0 0.0
        %938 = vmatpush1.msra.mxu0 0.0
        %939 = vmatprep.subr.mxu0 0.0
        %940 = vmatpush1.msra.mxu0 0.0
        %941 = vmatprep.subr.mxu0 0.0
        %942 = vmatpush1.msra.mxu0 0.0
        %943 = vmatprep.mubr.f32.mxu0 0.0
        %944 = vmatmul.mubr.f32.gmra.mrb[0].mxu0 %v797
        %v945 = vpop.f32.mrb[0].mxu0
        %v946 = vadd.f32 %v788, %v945
        %v947 = vpop.f32.mrb[0].mxu0
        %948 = vmatprep.mubr.f32.mxu0 0.0
        %949 = vmatmul.mubr.f32.gmra.mrb[0].mxu0 %v800
        %v950 = vpop.f32.mrb[0].mxu0
        %v951 = vadd.f32 %v793, %v950
        %v952 = vpop.f32.mrb[0].mxu0
        %953 = vdwg.mxu0
        %v954 = vld [vmem:[%s8] sm:$0xff]
        %v955 = vld [vmem:[%s8 + $0x8] sm:$0xff]
        %v956 = vld [vmem:[%s9] sm:$0xff]
        %v957 = vld [vmem:[%s9 + $0x8] sm:$0xff]
        %959 = vset.pattern.permute.xlu0 0
        %960 = vperm.xlu0 %959, %v956
        %v961 = vpop.permute.xlu0 %960
        %964 = vset.pattern.permute.xlu0 0
        %965 = vperm.xlu0 %964, %v957
        %v966 = vpop.permute.xlu0 %965
        %v969 = vsel %vm795, %v954, 0
        %v972 = vsel %vm795, %v955, 0
        %974 = vmatprep.subr.mxu0 %v871
        %975 = vmatpush1.msra.mxu0 %v869
        %976 = vmatprep.subr.mxu0 %v877
        %977 = vmatpush1.msra.mxu0 %v875
        %978 = vmatprep.subr.mxu0 0.0
        %979 = vmatpush1.msra.mxu0 0.0
        %980 = vmatprep.subr.mxu0 0.0
        %981 = vmatpush1.msra.mxu0 0.0
        %982 = vmatprep.subr.mxu0 0.0
        %983 = vmatpush1.msra.mxu0 0.0
        %984 = vmatprep.subr.mxu0 0.0
        %985 = vmatpush1.msra.mxu0 0.0
        %986 = vmatprep.subr.mxu0 0.0
        %987 = vmatpush1.msra.mxu0 0.0
        %988 = vmatprep.subr.mxu0 0.0
        %989 = vmatpush1.msra.mxu0 0.0
        %990 = vmatprep.subr.mxu0 0.0
        %991 = vmatpush1.msra.mxu0 0.0
        %992 = vmatprep.subr.mxu0 0.0
        %993 = vmatpush1.msra.mxu0 0.0
        %994 = vmatprep.subr.mxu0 0.0
        %995 = vmatpush1.msra.mxu0 0.0
        %996 = vmatprep.subr.mxu0 0.0
        %997 = vmatpush1.msra.mxu0 0.0
        %998 = vmatprep.subr.mxu0 0.0
        %999 = vmatpush1.msra.mxu0 0.0
        %1000 = vmatprep.subr.mxu0 0.0
        %1001 = vmatpush1.msra.mxu0 0.0
        %1002 = vmatprep.subr.mxu0 0.0
        %1003 = vmatpush1.msra.mxu0 0.0
        %1004 = vmatprep.subr.mxu0 0.0
        %1005 = vmatpush1.msra.mxu0 0.0
        %1006 = vmatprep.subr.mxu0 0.0
        %1007 = vmatpush1.msra.mxu0 0.0
        %1008 = vmatprep.subr.mxu0 0.0
        %1009 = vmatpush1.msra.mxu0 0.0
        %1010 = vmatprep.subr.mxu0 0.0
        %1011 = vmatpush1.msra.mxu0 0.0
        %1012 = vmatprep.subr.mxu0 0.0
        %1013 = vmatpush1.msra.mxu0 0.0
        %1014 = vmatprep.subr.mxu0 0.0
        %1015 = vmatpush1.msra.mxu0 0.0
        %1016 = vmatprep.subr.mxu0 0.0
        %1017 = vmatpush1.msra.mxu0 0.0
        %1018 = vmatprep.subr.mxu0 0.0
        %1019 = vmatpush1.msra.mxu0 0.0
        %1020 = vmatprep.subr.mxu0 0.0
        %1021 = vmatpush1.msra.mxu0 0.0
        %1022 = vmatprep.subr.mxu0 0.0
        %1023 = vmatpush1.msra.mxu0 0.0
        %1024 = vmatprep.subr.mxu0 0.0
        %1025 = vmatpush1.msra.mxu0 0.0
        %1026 = vmatprep.subr.mxu0 0.0
        %1027 = vmatpush1.msra.mxu0 0.0
        %1028 = vmatprep.subr.mxu0 0.0
        %1029 = vmatpush1.msra.mxu0 0.0
        %1030 = vmatprep.subr.mxu0 0.0
        %1031 = vmatpush1.msra.mxu0 0.0
        %1032 = vmatprep.subr.mxu0 0.0
        %1033 = vmatpush1.msra.mxu0 0.0
        %1034 = vmatprep.subr.mxu0 0.0
        %1035 = vmatpush1.msra.mxu0 0.0
        %1036 = vmatprep.subr.mxu0 0.0
        %1037 = vmatpush1.msra.mxu0 0.0
        %1038 = vmatprep.mubr.f32.mxu0 0.0
        %1039 = vmatmul.mubr.f32.gmra.mrb[0].mxu0 %v969
        %v1040 = vpop.f32.mrb[0].mxu0
        %v1041 = vadd.f32 %v961, %v1040
        %v1042 = vpop.f32.mrb[0].mxu0
        %v1043 = vadd.f32 %v961, %v1042
        %1044 = vmatprep.mubr.f32.mxu0 0.0
        %1045 = vmatmul.mubr.f32.gmra.mrb[0].mxu0 %v972
        %v1046 = vpop.f32.mrb[0].mxu0
        %v1047 = vadd.f32 %v966, %v1046
        %v1048 = vpop.f32.mrb[0].mxu0
        %v1049 = vadd.f32 %v966, %v1048
        %1050 = vdwg.mxu0
        %1051 = vmatprep.subr.mxu0 0.0
        %1052 = vmatpush1.msra.mxu0 %v946
        %1053 = vmatprep.subr.mxu0 0.0
        %1054 = vmatpush1.msra.mxu0 %v951
        %1055 = vmatprep.subr.mxu0 0.0
        %1056 = vmatpush1.msra.mxu0 0.0
        %1057 = vmatprep.subr.mxu0 0.0
        %1058 = vmatpush1.msra.mxu0 0.0
        %1059 = vmatprep.subr.mxu0 0.0
        %1060 = vmatpush1.msra.mxu0 0.0
        %1061 = vmatprep.subr.mxu0 0.0
        %1062 = vmatpush1.msra.mxu0 0.0
        %1063 = vmatprep.subr.mxu0 0.0
        %1064 = vmatpush1.msra.mxu0 0.0
        %1065 = vmatprep.subr.mxu0 0.0
        %1066 = vmatpush1.msra.mxu0 0.0
        %1067 = vmatprep.subr.mxu0 0.0
        %1068 = vmatpush1.msra.mxu0 0.0
        %1069 = vmatprep.subr.mxu0 0.0
        %1070 = vmatpush1.msra.mxu0 0.0
        %1071 = vmatprep.subr.mxu0 0.0
        %1072 = vmatpush1.msra.mxu0 0.0
        %1073 = vmatprep.subr.mxu0 0.0
        %1074 = vmatpush1.msra.mxu0 0.0
        %1075 = vmatprep.subr.mxu0 0.0
        %1076 = vmatpush1.msra.mxu0 0.0
        %1077 = vmatprep.subr.mxu0 0.0
        %1078 = vmatpush1.msra.mxu0 0.0
        %1079 = vmatprep.subr.mxu0 0.0
        %1080 = vmatpush1.msra.mxu0 0.0
        %1081 = vmatprep.subr.mxu0 0.0
        %1082 = vmatpush1.msra.mxu0 0.0
        %1083 = vmatprep.subr.mxu0 0.0
        %1084 = vmatpush1.msra.mxu0 0.0
        %1085 = vmatprep.subr.mxu0 0.0
        %1086 = vmatpush1.msra.mxu0 0.0
        %1087 = vmatprep.subr.mxu0 0.0
        %1088 = vmatpush1.msra.mxu0 0.0
        %1089 = vmatprep.subr.mxu0 0.0
        %1090 = vmatpush1.msra.mxu0 0.0
        %1091 = vmatprep.subr.mxu0 0.0
        %1092 = vmatpush1.msra.mxu0 0.0
        %1093 = vmatprep.subr.mxu0 0.0
        %1094 = vmatpush1.msra.mxu0 0.0
        %1095 = vmatprep.subr.mxu0 0.0
        %1096 = vmatpush1.msra.mxu0 0.0
        %1097 = vmatprep.subr.mxu0 0.0
        %1098 = vmatpush1.msra.mxu0 0.0
        %1099 = vmatprep.subr.mxu0 0.0
        %1100 = vmatpush1.msra.mxu0 0.0
        %1101 = vmatprep.subr.mxu0 0.0
        %1102 = vmatpush1.msra.mxu0 0.0
        %1103 = vmatprep.subr.mxu0 0.0
        %1104 = vmatpush1.msra.mxu0 0.0
        %1105 = vmatprep.subr.mxu0 0.0
        %1106 = vmatpush1.msra.mxu0 0.0
        %1107 = vmatprep.subr.mxu0 0.0
        %1108 = vmatpush1.msra.mxu0 0.0
        %1109 = vmatprep.subr.mxu0 0.0
        %1110 = vmatpush1.msra.mxu0 0.0
        %1111 = vmatprep.subr.mxu0 0.0
        %1112 = vmatpush1.msra.mxu0 0.0
        %1113 = vmatprep.subr.mxu0 0.0
        %1114 = vmatpush1.msra.mxu0 0.0
        %1115 = vmatprep.mubr.f32.mxu0 0.0
        %1116 = vmatmul.mubr.f32.gmra.mrb[0].mxu0 %v969
        %v1117 = vpop.f32.mrb[0].mxu0
        %v1118 = vadd.f32 %v961, %v1117
        %v1119 = vpop.f32.mrb[0].mxu0
        %1120 = vmatprep.mubr.f32.mxu0 0.0
        %1121 = vmatmul.mubr.f32.gmra.mrb[0].mxu0 %v972
        %v1122 = vpop.f32.mrb[0].mxu0
        %v1123 = vadd.f32 %v966, %v1122
        %v1124 = vpop.f32.mrb[0].mxu0
        %1125 = vdwg.mxu0
        %v1126 = vld [vmem:[%s6] sm:$0xff]
        %v1127 = vld [vmem:[%s6 + $0x8] sm:$0xff]
        %1128 = vrot.lane.b32.xlu0 %v571, 91
        %v1129 = vpop.permute.xlu0 %1128
        %1130 = vrot.lane.b32.xlu0 %v572, 91
        %v1131 = vpop.permute.xlu0 %1130
        %1132 = vrot.lane.b32.xlu0 %v573, 91
        %v1133 = vpop.permute.xlu0 %1132
        %vm1134 = vcmask 744448
        %v1135 = vsel %vm1134, %v1129, %v1131
        %v1136 = vsel %vm1134, %v1131, %v1133
        %vm1140 = vcmask 64512
        %v1142 = vsel %vm1140, %v1126, 0
        %v1145 = vsel %vm1140, %v1127, 0
        %1147 = vmatprep.subr.mxu0 %v1136
        %1148 = vmatpush1.msra.mxu0 %v1135
        %1149 = vmatprep.subr.mxu0 0.0
        %1150 = vmatpush1.msra.mxu0 0.0
        %1151 = vmatprep.subr.mxu0 0.0
        %1152 = vmatpush1.msra.mxu0 0.0
        %1153 = vmatprep.subr.mxu0 0.0
        %1154 = vmatpush1.msra.mxu0 0.0
        %1155 = vmatprep.subr.mxu0 0.0
        %1156 = vmatpush1.msra.mxu0 0.0
        %1157 = vmatprep.subr.mxu0 0.0
        %1158 = vmatpush1.msra.mxu0 0.0
        %1159 = vmatprep.subr.mxu0 0.0
        %1160 = vmatpush1.msra.mxu0 0.0
        %1161 = vmatprep.subr.mxu0 0.0
        %1162 = vmatpush1.msra.mxu0 0.0
        %1163 = vmatprep.subr.mxu0 0.0
        %1164 = vmatpush1.msra.mxu0 0.0
        %1165 = vmatprep.subr.mxu0 0.0
        %1166 = vmatpush1.msra.mxu0 0.0
        %1167 = vmatprep.subr.mxu0 0.0
        %1168 = vmatpush1.msra.mxu0 0.0
        %1169 = vmatprep.subr.mxu0 0.0
        %1170 = vmatpush1.msra.mxu0 0.0
        %1171 = vmatprep.subr.mxu0 0.0
        %1172 = vmatpush1.msra.mxu0 0.0
        %1173 = vmatprep.subr.mxu0 0.0
        %1174 = vmatpush1.msra.mxu0 0.0
        %1175 = vmatprep.subr.mxu0 0.0
        %1176 = vmatpush1.msra.mxu0 0.0
        %1177 = vmatprep.subr.mxu0 0.0
        %1178 = vmatpush1.msra.mxu0 0.0
        %1179 = vmatprep.subr.mxu0 0.0
        %1180 = vmatpush1.msra.mxu0 0.0
        %1181 = vmatprep.subr.mxu0 0.0
        %1182 = vmatpush1.msra.mxu0 0.0
        %1183 = vmatprep.subr.mxu0 0.0
        %1184 = vmatpush1.msra.mxu0 0.0
        %1185 = vmatprep.subr.mxu0 0.0
        %1186 = vmatpush1.msra.mxu0 0.0
        %1187 = vmatprep.subr.mxu0 0.0
        %1188 = vmatpush1.msra.mxu0 0.0
        %1189 = vmatprep.subr.mxu0 0.0
        %1190 = vmatpush1.msra.mxu0 0.0
        %1191 = vmatprep.subr.mxu0 0.0
        %1192 = vmatpush1.msra.mxu0 0.0
        %1193 = vmatprep.subr.mxu0 0.0
        %1194 = vmatpush1.msra.mxu0 0.0
        %1195 = vmatprep.subr.mxu0 0.0
        %1196 = vmatpush1.msra.mxu0 0.0
        %1197 = vmatprep.subr.mxu0 0.0
        %1198 = vmatpush1.msra.mxu0 0.0
        %1199 = vmatprep.subr.mxu0 0.0
        %1200 = vmatpush1.msra.mxu0 0.0
        %1201 = vmatprep.subr.mxu0 0.0
        %1202 = vmatpush1.msra.mxu0 0.0
        %1203 = vmatprep.subr.mxu0 0.0
        %1204 = vmatpush1.msra.mxu0 0.0
        %1205 = vmatprep.subr.mxu0 0.0
        %1206 = vmatpush1.msra.mxu0 0.0
        %1207 = vmatprep.subr.mxu0 0.0
        %1208 = vmatpush1.msra.mxu0 0.0
        %1209 = vmatprep.subr.mxu0 0.0
        %1210 = vmatpush1.msra.mxu0 0.0
        %1211 = vmatprep.mubr.f32.mxu0 0.0
        %1212 = vmatmul.mubr.f32.gmra.mrb[0].mxu0 %v1142
        %v1213 = vpop.f32.mrb[0].mxu0
        %v1214 = vadd.f32 0.0, %v1213
        %v1215 = vpop.f32.mrb[0].mxu0
        %v1216 = vadd.f32 0.0, %v1215
        %1217 = vmatprep.mubr.f32.mxu0 0.0
        %1218 = vmatmul.mubr.f32.gmra.mrb[0].mxu0 %v1145
        %v1219 = vpop.f32.mrb[0].mxu0
        %v1220 = vadd.f32 0.0, %v1219
        %v1221 = vpop.f32.mrb[0].mxu0
        %v1222 = vadd.f32 0.0, %v1221
        %1223 = vdwg.mxu0
        %1224 = vmatprep.subr.mxu0 0.0
        %1225 = vmatpush1.msra.mxu0 %v1133
        %1226 = vmatprep.subr.mxu0 0.0
        %1227 = vmatpush1.msra.mxu0 0.0
        %1228 = vmatprep.subr.mxu0 0.0
        %1229 = vmatpush1.msra.mxu0 0.0
        %1230 = vmatprep.subr.mxu0 0.0
        %1231 = vmatpush1.msra.mxu0 0.0
        %1232 = vmatprep.subr.mxu0 0.0
        %1233 = vmatpush1.msra.mxu0 0.0
        %1234 = vmatprep.subr.mxu0 0.0
        %1235 = vmatpush1.msra.mxu0 0.0
        %1236 = vmatprep.subr.mxu0 0.0
        %1237 = vmatpush1.msra.mxu0 0.0
        %1238 = vmatprep.subr.mxu0 0.0
        %1239 = vmatpush1.msra.mxu0 0.0
        %1240 = vmatprep.subr.mxu0 0.0
        %1241 = vmatpush1.msra.mxu0 0.0
        %1242 = vmatprep.subr.mxu0 0.0
        %1243 = vmatpush1.msra.mxu0 0.0
        %1244 = vmatprep.subr.mxu0 0.0
        %1245 = vmatpush1.msra.mxu0 0.0
        %1246 = vmatprep.subr.mxu0 0.0
        %1247 = vmatpush1.msra.mxu0 0.0
        %1248 = vmatprep.subr.mxu0 0.0
        %1249 = vmatpush1.msra.mxu0 0.0
        %1250 = vmatprep.subr.mxu0 0.0
        %1251 = vmatpush1.msra.mxu0 0.0
        %1252 = vmatprep.subr.mxu0 0.0
        %1253 = vmatpush1.msra.mxu0 0.0
        %1254 = vmatprep.subr.mxu0 0.0
        %1255 = vmatpush1.msra.mxu0 0.0
        %1256 = vmatprep.subr.mxu0 0.0
        %1257 = vmatpush1.msra.mxu0 0.0
        %1258 = vmatprep.subr.mxu0 0.0
        %1259 = vmatpush1.msra.mxu0 0.0
        %1260 = vmatprep.subr.mxu0 0.0
        %1261 = vmatpush1.msra.mxu0 0.0
        %1262 = vmatprep.subr.mxu0 0.0
        %1263 = vmatpush1.msra.mxu0 0.0
        %1264 = vmatprep.subr.mxu0 0.0
        %1265 = vmatpush1.msra.mxu0 0.0
        %1266 = vmatprep.subr.mxu0 0.0
        %1267 = vmatpush1.msra.mxu0 0.0
        %1268 = vmatprep.subr.mxu0 0.0
        %1269 = vmatpush1.msra.mxu0 0.0
        %1270 = vmatprep.subr.mxu0 0.0
        %1271 = vmatpush1.msra.mxu0 0.0
        %1272 = vmatprep.subr.mxu0 0.0
        %1273 = vmatpush1.msra.mxu0 0.0
        %1274 = vmatprep.subr.mxu0 0.0
        %1275 = vmatpush1.msra.mxu0 0.0
        %1276 = vmatprep.subr.mxu0 0.0
        %1277 = vmatpush1.msra.mxu0 0.0
        %1278 = vmatprep.subr.mxu0 0.0
        %1279 = vmatpush1.msra.mxu0 0.0
        %1280 = vmatprep.subr.mxu0 0.0
        %1281 = vmatpush1.msra.mxu0 0.0
        %1282 = vmatprep.subr.mxu0 0.0
        %1283 = vmatpush1.msra.mxu0 0.0
        %1284 = vmatprep.subr.mxu0 0.0
        %1285 = vmatpush1.msra.mxu0 0.0
        %1286 = vmatprep.subr.mxu0 0.0
        %1287 = vmatpush1.msra.mxu0 0.0
        %1288 = vmatprep.mubr.f32.mxu0 0.0
        %1289 = vmatmul.mubr.f32.gmra.mrb[0].mxu0 %v1142
        %v1290 = vpop.f32.mrb[0].mxu0
        %v1291 = vadd.f32 0.0, %v1290
        %v1292 = vpop.f32.mrb[0].mxu0
        %1293 = vmatprep.mubr.f32.mxu0 0.0
        %1294 = vmatmul.mubr.f32.gmra.mrb[0].mxu0 %v1145
        %v1295 = vpop.f32.mrb[0].mxu0
        %v1296 = vadd.f32 0.0, %v1295
        %v1297 = vpop.f32.mrb[0].mxu0
        %1298 = vdwg.mxu0
        %v1299 = vadd.f32 %v869, %v1214
        %v1300 = vadd.f32 %v871, %v1216
        %v1301 = vadd.f32 %v946, %v1291
        %v1302 = vadd.f32 %v875, %v1220
        %v1303 = vadd.f32 %v877, %v1222
        %v1304 = vadd.f32 %v951, %v1296
        %v1305 = vld [vmem:[%s7] sm:$0xff]
        %v1306 = vld [vmem:[%s7 + $0x8] sm:$0xff]
        %1308 = vset.pattern.permute.xlu0 0
        %1309 = vperm.xlu0 %1308, %v1305
        %v1310 = vpop.permute.xlu0 %1309
        %1313 = vset.pattern.permute.xlu0 0
        %1314 = vperm.xlu0 %1313, %v1306
        %v1315 = vpop.permute.xlu0 %1314
        %v1317 = vadd.f32 %v1299, %v1310
        %v1318 = vadd.f32 %v1300, %v1310
        %v1319 = vadd.f32 %v1301, %v1310
        %v1320 = vadd.f32 %v1302, %v1315
        %v1321 = vadd.f32 %v1303, %v1315
        %v1322 = vadd.f32 %v1304, %v1315
        %v1323 = vtanh.pop %v1317
        %v1324 = vtanh.pop %v1318
        %v1325 = vtanh.pop %v1319
        %v1326 = vxor.u32 %v1320, 2147483648
        %v1327 = vxor.u32 %v1321, 2147483648
        %v1328 = vxor.u32 %v1322, 2147483648
        %v1329 = vmul.f32 %v1326, 1.442695
        %v1330 = vpow.pop %v1329
        %v1331 = vmul.f32 %v1327, 1.442695
        %v1332 = vpow.pop %v1331
        %v1333 = vmul.f32 %v1328, 1.442695
        %v1334 = vpow.pop %v1333
        %v1335 = vadd.f32 %v1330, 1.0
        %v1336 = vadd.f32 %v1332, 1.0
        %v1337 = vadd.f32 %v1334, 1.0
        %v1338 = vrcp.pop %v1335
        %v1339 = vmul.f32 1.0, %v1338
        %v1340 = vrcp.pop %v1336
        %v1341 = vmul.f32 1.0, %v1340
        %v1342 = vrcp.pop %v1337
        %v1343 = vmul.f32 1.0, %v1342
        %v1344 = vmul.f32 %v1323, %v1339
        %v1345 = vmul.f32 %v1324, %v1341
        %v1346 = vmul.f32 %v1325, %v1343
        %1347 = vst [vmem:[%s546] sm:$0xff] %v1344
        %1348 = vst [vmem:[%s546 + $0x8] sm:$0xff] %v1345
        %vm1349 = vcmask 261120
        %1350 = vst.msk [vmem:[%s546 + $0x10] sm:$0xff] %vm1349, %v1346
        %1354 = vrot.lane.b32.xlu0 %v574, 127
        %v1355 = vpop.permute.xlu0 %1354
        %1356 = vrot.lane.b32.xlu0 %v575, 127
        %v1357 = vpop.permute.xlu0 %1356
        %1358 = vrot.lane.b32.xlu0 %v576, 127
        %v1359 = vpop.permute.xlu0 %1358
        %v1360 = vsel %vm586, %v1355, %v1357
        %v1361 = vsel %vm586, %v1357, %v1359
        %v1362 = vld [vmem:[%s10] sm:$0xff]
        %v1363 = vld [vmem:[%s10 + $0x8] sm:$0xff]
        %1364 = vrot.lane.b32.xlu0 %v574, 92
        %v1365 = vpop.permute.xlu0 %1364
        %1366 = vrot.lane.b32.xlu0 %v575, 92
        %v1367 = vpop.permute.xlu0 %1366
        %1368 = vrot.lane.b32.xlu0 %v576, 92
        %v1369 = vpop.permute.xlu0 %1368
        %1370 = vrot.lane.b32.xlu0 %v1360, 92
        %v1371 = vpop.permute.xlu0 %1370
        %1372 = vrot.lane.b32.xlu0 %v1361, 92
        %v1373 = vpop.permute.xlu0 %1372
        %1374 = vrot.lane.b32.xlu0 %v1359, 92
        %v1375 = vpop.permute.xlu0 %1374
        %vm1376 = vcmask 752640
        %v1377 = vsel %vm1376, %v1365, %v1367
        %v1378 = vsel %vm1376, %v1367, %v1369
        %v1379 = vsel %vm1376, %v1371, %v1373
        %v1380 = vsel %vm1376, %v1373, %v1375
        %v1388 = vsel %vm795, %v1362, 0
        %v1391 = vsel %vm795, %v1363, 0
        %1393 = vmatprep.subr.mxu0 %v1378
        %1394 = vmatpush1.msra.mxu0 %v1377
        %1395 = vmatprep.subr.mxu0 %v1380
        %1396 = vmatpush1.msra.mxu0 %v1379
        %1397 = vmatprep.subr.mxu0 0.0
        %1398 = vmatpush1.msra.mxu0 0.0
        %1399 = vmatprep.subr.mxu0 0.0
        %1400 = vmatpush1.msra.mxu0 0.0
        %1401 = vmatprep.subr.mxu0 0.0
        %1402 = vmatpush1.msra.mxu0 0.0
        %1403 = vmatprep.subr.mxu0 0.0
        %1404 = vmatpush1.msra.mxu0 0.0
        %1405 = vmatprep.subr.mxu0 0.0
        %1406 = vmatpush1.msra.mxu0 0.0
        %1407 = vmatprep.subr.mxu0 0.0
        %1408 = vmatpush1.msra.mxu0 0.0
        %1409 = vmatprep.subr.mxu0 0.0
        %1410 = vmatpush1.msra.mxu0 0.0
        %1411 = vmatprep.subr.mxu0 0.0
        %1412 = vmatpush1.msra.mxu0 0.0
        %1413 = vmatprep.subr.mxu0 0.0
        %1414 = vmatpush1.msra.mxu0 0.0
        %1415 = vmatprep.subr.mxu0 0.0
        %1416 = vmatpush1.msra.mxu0 0.0
        %1417 = vmatprep.subr.mxu0 0.0
        %1418 = vmatpush1.msra.mxu0 0.0
        %1419 = vmatprep.subr.mxu0 0.0
        %1420 = vmatpush1.msra.mxu0 0.0
        %1421 = vmatprep.subr.mxu0 0.0
        %1422 = vmatpush1.msra.mxu0 0.0
        %1423 = vmatprep.subr.mxu0 0.0
        %1424 = vmatpush1.msra.mxu0 0.0
        %1425 = vmatprep.subr.mxu0 0.0
        %1426 = vmatpush1.msra.mxu0 0.0
        %1427 = vmatprep.subr.mxu0 0.0
        %1428 = vmatpush1.msra.mxu0 0.0
        %1429 = vmatprep.subr.mxu0 0.0
        %1430 = vmatpush1.msra.mxu0 0.0
        %1431 = vmatprep.subr.mxu0 0.0
        %1432 = vmatpush1.msra.mxu0 0.0
        %1433 = vmatprep.subr.mxu0 0.0
        %1434 = vmatpush1.msra.mxu0 0.0
        %1435 = vmatprep.subr.mxu0 0.0
        %1436 = vmatpush1.msra.mxu0 0.0
        %1437 = vmatprep.subr.mxu0 0.0
        %1438 = vmatpush1.msra.mxu0 0.0
        %1439 = vmatprep.subr.mxu0 0.0
        %1440 = vmatpush1.msra.mxu0 0.0
        %1441 = vmatprep.subr.mxu0 0.0
        %1442 = vmatpush1.msra.mxu0 0.0
        %1443 = vmatprep.subr.mxu0 0.0
        %1444 = vmatpush1.msra.mxu0 0.0
        %1445 = vmatprep.subr.mxu0 0.0
        %1446 = vmatpush1.msra.mxu0 0.0
        %1447 = vmatprep.subr.mxu0 0.0
        %1448 = vmatpush1.msra.mxu0 0.0
        %1449 = vmatprep.subr.mxu0 0.0
        %1450 = vmatpush1.msra.mxu0 0.0
        %1451 = vmatprep.subr.mxu0 0.0
        %1452 = vmatpush1.msra.mxu0 0.0
        %1453 = vmatprep.subr.mxu0 0.0
        %1454 = vmatpush1.msra.mxu0 0.0
        %1455 = vmatprep.subr.mxu0 0.0
        %1456 = vmatpush1.msra.mxu0 0.0
        %1457 = vmatprep.mubr.f32.mxu0 0.0
        %1458 = vmatmul.mubr.f32.gmra.mrb[0].mxu0 %v1388
        %v1459 = vpop.f32.mrb[0].mxu0
        %v1460 = vadd.f32 0.0, %v1459
        %v1461 = vpop.f32.mrb[0].mxu0
        %v1462 = vadd.f32 0.0, %v1461
        %1463 = vmatprep.mubr.f32.mxu0 0.0
        %1464 = vmatmul.mubr.f32.gmra.mrb[0].mxu0 %v1391
        %v1465 = vpop.f32.mrb[0].mxu0
        %v1466 = vadd.f32 0.0, %v1465
        %v1467 = vpop.f32.mrb[0].mxu0
        %v1468 = vadd.f32 0.0, %v1467
        %1469 = vdwg.mxu0
        %1470 = vmatprep.subr.mxu0 0.0
        %1471 = vmatpush1.msra.mxu0 %v1369
        %1472 = vmatprep.subr.mxu0 0.0
        %1473 = vmatpush1.msra.mxu0 %v1375
        %1474 = vmatprep.subr.mxu0 0.0
        %1475 = vmatpush1.msra.mxu0 0.0
        %1476 = vmatprep.subr.mxu0 0.0
        %1477 = vmatpush1.msra.mxu0 0.0
        %1478 = vmatprep.subr.mxu0 0.0
        %1479 = vmatpush1.msra.mxu0 0.0
        %1480 = vmatprep.subr.mxu0 0.0
        %1481 = vmatpush1.msra.mxu0 0.0
        %1482 = vmatprep.subr.mxu0 0.0
        %1483 = vmatpush1.msra.mxu0 0.0
        %1484 = vmatprep.subr.mxu0 0.0
        %1485 = vmatpush1.msra.mxu0 0.0
        %1486 = vmatprep.subr.mxu0 0.0
        %1487 = vmatpush1.msra.mxu0 0.0
        %1488 = vmatprep.subr.mxu0 0.0
        %1489 = vmatpush1.msra.mxu0 0.0
        %1490 = vmatprep.subr.mxu0 0.0
        %1491 = vmatpush1.msra.mxu0 0.0
        %1492 = vmatprep.subr.mxu0 0.0
        %1493 = vmatpush1.msra.mxu0 0.0
        %1494 = vmatprep.subr.mxu0 0.0
        %1495 = vmatpush1.msra.mxu0 0.0
        %1496 = vmatprep.subr.mxu0 0.0
        %1497 = vmatpush1.msra.mxu0 0.0
        %1498 = vmatprep.subr.mxu0 0.0
        %1499 = vmatpush1.msra.mxu0 0.0
        %1500 = vmatprep.subr.mxu0 0.0
        %1501 = vmatpush1.msra.mxu0 0.0
        %1502 = vmatprep.subr.mxu0 0.0
        %1503 = vmatpush1.msra.mxu0 0.0
        %1504 = vmatprep.subr.mxu0 0.0
        %1505 = vmatpush1.msra.mxu0 0.0
        %1506 = vmatprep.subr.mxu0 0.0
        %1507 = vmatpush1.msra.mxu0 0.0
        %1508 = vmatprep.subr.mxu0 0.0
        %1509 = vmatpush1.msra.mxu0 0.0
        %1510 = vmatprep.subr.mxu0 0.0
        %1511 = vmatpush1.msra.mxu0 0.0
        %1512 = vmatprep.subr.mxu0 0.0
        %1513 = vmatpush1.msra.mxu0 0.0
        %1514 = vmatprep.subr.mxu0 0.0
        %1515 = vmatpush1.msra.mxu0 0.0
        %1516 = vmatprep.subr.mxu0 0.0
        %1517 = vmatpush1.msra.mxu0 0.0
        %1518 = vmatprep.subr.mxu0 0.0
        %1519 = vmatpush1.msra.mxu0 0.0
        %1520 = vmatprep.subr.mxu0 0.0
        %1521 = vmatpush1.msra.mxu0 0.0
        %1522 = vmatprep.subr.mxu0 0.0
        %1523 = vmatpush1.msra.mxu0 0.0
        %1524 = vmatprep.subr.mxu0 0.0
        %1525 = vmatpush1.msra.mxu0 0.0
        %1526 = vmatprep.subr.mxu0 0.0
        %1527 = vmatpush1.msra.mxu0 0.0
        %1528 = vmatprep.subr.mxu0 0.0
        %1529 = vmatpush1.msra.mxu0 0.0
        %1530 = vmatprep.subr.mxu0 0.0
        %1531 = vmatpush1.msra.mxu0 0.0
        %1532 = vmatprep.subr.mxu0 0.0
        %1533 = vmatpush1.msra.mxu0 0.0
        %1534 = vmatprep.mubr.f32.mxu0 0.0
        %1535 = vmatmul.mubr.f32.gmra.mrb[0].mxu0 %v1388
        %v1536 = vpop.f32.mrb[0].mxu0
        %v1537 = vadd.f32 0.0, %v1536
        %v1538 = vpop.f32.mrb[0].mxu0
        %1539 = vmatprep.mubr.f32.mxu0 0.0
        %1540 = vmatmul.mubr.f32.gmra.mrb[0].mxu0 %v1391
        %v1541 = vpop.f32.mrb[0].mxu0
        %v1542 = vadd.f32 0.0, %v1541
        %v1543 = vpop.f32.mrb[0].mxu0
        %1544 = vdwg.mxu0
        %v1545 = vadd.f32 %v1041, %v1460
        %v1546 = vadd.f32 %v1043, %v1462
        %v1547 = vadd.f32 %v1118, %v1537
        %v1548 = vadd.f32 %v1047, %v1466
        %v1549 = vadd.f32 %v1049, %v1468
        %v1550 = vadd.f32 %v1123, %v1542
        %v1551 = vld [vmem:[%s11] sm:$0xff]
        %v1552 = vld [vmem:[%s11 + $0x8] sm:$0xff]
        %1554 = vset.pattern.permute.xlu0 0
        %1555 = vperm.xlu0 %1554, %v1551
        %v1556 = vpop.permute.xlu0 %1555
        %1559 = vset.pattern.permute.xlu0 0
        %1560 = vperm.xlu0 %1559, %v1552
        %v1561 = vpop.permute.xlu0 %1560
        %v1563 = vadd.f32 %v1545, %v1556
        %v1564 = vadd.f32 %v1546, %v1556
        %v1565 = vadd.f32 %v1547, %v1556
        %v1566 = vadd.f32 %v1548, %v1561
        %v1567 = vadd.f32 %v1549, %v1561
        %v1568 = vadd.f32 %v1550, %v1561
        %v1569 = vtanh.pop %v1563
        %v1570 = vtanh.pop %v1564
        %v1571 = vtanh.pop %v1565
        %v1572 = vxor.u32 %v1566, 2147483648
        %v1573 = vxor.u32 %v1567, 2147483648
        %v1574 = vxor.u32 %v1568, 2147483648
        %v1575 = vmul.f32 %v1572, 1.442695
        %v1576 = vpow.pop %v1575
        %v1577 = vmul.f32 %v1573, 1.442695
        %v1578 = vpow.pop %v1577
        %v1579 = vmul.f32 %v1574, 1.442695
        %v1580 = vpow.pop %v1579
        %v1581 = vadd.f32 %v1576, 1.0
        %v1582 = vadd.f32 %v1578, 1.0
        %v1583 = vadd.f32 %v1580, 1.0
        %v1584 = vrcp.pop %v1581
        %v1585 = vmul.f32 1.0, %v1584
        %v1586 = vrcp.pop %v1582
        %v1587 = vmul.f32 1.0, %v1586
        %v1588 = vrcp.pop %v1583
        %v1589 = vmul.f32 1.0, %v1588
        %v1590 = vmul.f32 %v1569, %v1585
        %v1591 = vmul.f32 %v1570, %v1587
        %v1592 = vmul.f32 %v1571, %v1589
        %v1593 = vld [vmem:[%s12] sm:$0xff]
        %v1594 = vld [vmem:[%s12 + $0x8] sm:$0xff]
        %v1595 = vld [vmem:[%s13] sm:$0xff]
        %v1596 = vld [vmem:[%s13 + $0x8] sm:$0xff]
        %1598 = vset.pattern.permute.xlu0 0
        %1599 = vperm.xlu0 %1598, %v1595
        %v1600 = vpop.permute.xlu0 %1599
        %1603 = vset.pattern.permute.xlu0 0
        %1604 = vperm.xlu0 %1603, %v1596
        %v1605 = vpop.permute.xlu0 %1604
        %v1608 = vsel %vm1140, %v1593, 0
        %v1611 = vsel %vm1140, %v1594, 0
        %1613 = vmatprep.subr.mxu0 %v1591
        %1614 = vmatpush1.msra.mxu0 %v1590
        %1615 = vmatprep.subr.mxu0 0.0
        %1616 = vmatpush1.msra.mxu0 0.0
        %1617 = vmatprep.subr.mxu0 0.0
        %1618 = vmatpush1.msra.mxu0 0.0
        %1619 = vmatprep.subr.mxu0 0.0
        %1620 = vmatpush1.msra.mxu0 0.0
        %1621 = vmatprep.subr.mxu0 0.0
        %1622 = vmatpush1.msra.mxu0 0.0
        %1623 = vmatprep.subr.mxu0 0.0
        %1624 = vmatpush1.msra.mxu0 0.0
        %1625 = vmatprep.subr.mxu0 0.0
        %1626 = vmatpush1.msra.mxu0 0.0
        %1627 = vmatprep.subr.mxu0 0.0
        %1628 = vmatpush1.msra.mxu0 0.0
        %1629 = vmatprep.subr.mxu0 0.0
        %1630 = vmatpush1.msra.mxu0 0.0
        %1631 = vmatprep.subr.mxu0 0.0
        %1632 = vmatpush1.msra.mxu0 0.0
        %1633 = vmatprep.subr.mxu0 0.0
        %1634 = vmatpush1.msra.mxu0 0.0
        %1635 = vmatprep.subr.mxu0 0.0
        %1636 = vmatpush1.msra.mxu0 0.0
        %1637 = vmatprep.subr.mxu0 0.0
        %1638 = vmatpush1.msra.mxu0 0.0
        %1639 = vmatprep.subr.mxu0 0.0
        %1640 = vmatpush1.msra.mxu0 0.0
        %1641 = vmatprep.subr.mxu0 0.0
        %1642 = vmatpush1.msra.mxu0 0.0
        %1643 = vmatprep.subr.mxu0 0.0
        %1644 = vmatpush1.msra.mxu0 0.0
        %1645 = vmatprep.subr.mxu0 0.0
        %1646 = vmatpush1.msra.mxu0 0.0
        %1647 = vmatprep.subr.mxu0 0.0
        %1648 = vmatpush1.msra.mxu0 0.0
        %1649 = vmatprep.subr.mxu0 0.0
        %1650 = vmatpush1.msra.mxu0 0.0
        %1651 = vmatprep.subr.mxu0 0.0
        %1652 = vmatpush1.msra.mxu0 0.0
        %1653 = vmatprep.subr.mxu0 0.0
        %1654 = vmatpush1.msra.mxu0 0.0
        %1655 = vmatprep.subr.mxu0 0.0
        %1656 = vmatpush1.msra.mxu0 0.0
        %1657 = vmatprep.subr.mxu0 0.0
        %1658 = vmatpush1.msra.mxu0 0.0
        %1659 = vmatprep.subr.mxu0 0.0
        %1660 = vmatpush1.msra.mxu0 0.0
        %1661 = vmatprep.subr.mxu0 0.0
        %1662 = vmatpush1.msra.mxu0 0.0
        %1663 = vmatprep.subr.mxu0 0.0
        %1664 = vmatpush1.msra.mxu0 0.0
        %1665 = vmatprep.subr.mxu0 0.0
        %1666 = vmatpush1.msra.mxu0 0.0
        %1667 = vmatprep.subr.mxu0 0.0
        %1668 = vmatpush1.msra.mxu0 0.0
        %1669 = vmatprep.subr.mxu0 0.0
        %1670 = vmatpush1.msra.mxu0 0.0
        %1671 = vmatprep.subr.mxu0 0.0
        %1672 = vmatpush1.msra.mxu0 0.0
        %1673 = vmatprep.subr.mxu0 0.0
        %1674 = vmatpush1.msra.mxu0 0.0
        %1675 = vmatprep.subr.mxu0 0.0
        %1676 = vmatpush1.msra.mxu0 0.0
        %1677 = vmatprep.mubr.f32.mxu0 0.0
        %1678 = vmatmul.mubr.f32.gmra.mrb[0].mxu0 %v1608
        %v1679 = vpop.f32.mrb[0].mxu0
        %v1680 = vadd.f32 %v1600, %v1679
        %v1681 = vpop.f32.mrb[0].mxu0
        %v1682 = vadd.f32 %v1600, %v1681
        %1683 = vmatprep.mubr.f32.mxu0 0.0
        %1684 = vmatmul.mubr.f32.gmra.mrb[0].mxu0 %v1611
        %v1685 = vpop.f32.mrb[0].mxu0
        %v1686 = vadd.f32 %v1605, %v1685
        %v1687 = vpop.f32.mrb[0].mxu0
        %v1688 = vadd.f32 %v1605, %v1687
        %1689 = vdwg.mxu0
        %1690 = vmatprep.subr.mxu0 0.0
        %1691 = vmatpush1.msra.mxu0 %v1592
        %1692 = vmatprep.subr.mxu0 0.0
        %1693 = vmatpush1.msra.mxu0 0.0
        %1694 = vmatprep.subr.mxu0 0.0
        %1695 = vmatpush1.msra.mxu0 0.0
        %1696 = vmatprep.subr.mxu0 0.0
        %1697 = vmatpush1.msra.mxu0 0.0
        %1698 = vmatprep.subr.mxu0 0.0
        %1699 = vmatpush1.msra.mxu0 0.0
        %1700 = vmatprep.subr.mxu0 0.0
        %1701 = vmatpush1.msra.mxu0 0.0
        %1702 = vmatprep.subr.mxu0 0.0
        %1703 = vmatpush1.msra.mxu0 0.0
        %1704 = vmatprep.subr.mxu0 0.0
        %1705 = vmatpush1.msra.mxu0 0.0
        %1706 = vmatprep.subr.mxu0 0.0
        %1707 = vmatpush1.msra.mxu0 0.0
        %1708 = vmatprep.subr.mxu0 0.0
        %1709 = vmatpush1.msra.mxu0 0.0
        %1710 = vmatprep.subr.mxu0 0.0
        %1711 = vmatpush1.msra.mxu0 0.0
        %1712 = vmatprep.subr.mxu0 0.0
        %1713 = vmatpush1.msra.mxu0 0.0
        %1714 = vmatprep.subr.mxu0 0.0
        %1715 = vmatpush1.msra.mxu0 0.0
        %1716 = vmatprep.subr.mxu0 0.0
        %1717 = vmatpush1.msra.mxu0 0.0
        %1718 = vmatprep.subr.mxu0 0.0
        %1719 = vmatpush1.msra.mxu0 0.0
        %1720 = vmatprep.subr.mxu0 0.0
        %1721 = vmatpush1.msra.mxu0 0.0
        %1722 = vmatprep.subr.mxu0 0.0
        %1723 = vmatpush1.msra.mxu0 0.0
        %1724 = vmatprep.subr.mxu0 0.0
        %1725 = vmatpush1.msra.mxu0 0.0
        %1726 = vmatprep.subr.mxu0 0.0
        %1727 = vmatpush1.msra.mxu0 0.0
        %1728 = vmatprep.subr.mxu0 0.0
        %1729 = vmatpush1.msra.mxu0 0.0
        %1730 = vmatprep.subr.mxu0 0.0
        %1731 = vmatpush1.msra.mxu0 0.0
        %1732 = vmatprep.subr.mxu0 0.0
        %1733 = vmatpush1.msra.mxu0 0.0
        %1734 = vmatprep.subr.mxu0 0.0
        %1735 = vmatpush1.msra.mxu0 0.0
        %1736 = vmatprep.subr.mxu0 0.0
        %1737 = vmatpush1.msra.mxu0 0.0
        %1738 = vmatprep.subr.mxu0 0.0
        %1739 = vmatpush1.msra.mxu0 0.0
        %1740 = vmatprep.subr.mxu0 0.0
        %1741 = vmatpush1.msra.mxu0 0.0
        %1742 = vmatprep.subr.mxu0 0.0
        %1743 = vmatpush1.msra.mxu0 0.0
        %1744 = vmatprep.subr.mxu0 0.0
        %1745 = vmatpush1.msra.mxu0 0.0
        %1746 = vmatprep.subr.mxu0 0.0
        %1747 = vmatpush1.msra.mxu0 0.0
        %1748 = vmatprep.subr.mxu0 0.0
        %1749 = vmatpush1.msra.mxu0 0.0
        %1750 = vmatprep.subr.mxu0 0.0
        %1751 = vmatpush1.msra.mxu0 0.0
        %1752 = vmatprep.subr.mxu0 0.0
        %1753 = vmatpush1.msra.mxu0 0.0
        %1754 = vmatprep.mubr.f32.mxu0 0.0
        %1755 = vmatmul.mubr.f32.gmra.mrb[0].mxu0 %v1608
        %v1756 = vpop.f32.mrb[0].mxu0
        %v1757 = vadd.f32 %v1600, %v1756
        %v1758 = vpop.f32.mrb[0].mxu0
        %1759 = vmatprep.mubr.f32.mxu0 0.0
        %1760 = vmatmul.mubr.f32.gmra.mrb[0].mxu0 %v1611
        %v1761 = vpop.f32.mrb[0].mxu0
        %v1762 = vadd.f32 %v1605, %v1761
        %v1763 = vpop.f32.mrb[0].mxu0
        %1764 = vdwg.mxu0
        %1765 = vrot.lane.b32.xlu0 %v574, 91
        %v1766 = vpop.permute.xlu0 %1765
        %1767 = vrot.lane.b32.xlu0 %v575, 91
        %v1768 = vpop.permute.xlu0 %1767
        %1769 = vrot.lane.b32.xlu0 %v576, 91
        %v1770 = vpop.permute.xlu0 %1769
        %v1771 = vsel %vm1134, %v1766, %v1768
        %v1772 = vsel %vm1134, %v1768, %v1770
        %v1776 = vadd.f32 %v1680, %v1771
        %v1777 = vadd.f32 %v1682, %v1772
        %v1778 = vadd.f32 %v1757, %v1770
        %1779 = vst [vmem:[%s553] sm:$0xff] %v1776
        %1780 = vst [vmem:[%s553 + $0x8] sm:$0xff] %v1777
        %1781 = vst.msk [vmem:[%s553 + $0x10] sm:$0xff] %vm1349, %v1778
        %1782 = vst [vmem:[%s560] sm:$0xff] %v1686
        %1783 = vst [vmem:[%s560 + $0x8] sm:$0xff] %v1688
        %1784 = vst.msk [vmem:[%s560 + $0x10] sm:$0xff] %vm1349, %v1762
        %s1785 = sand.u32 %s347, 1
        %s1786 = scalar_lea.sflag [#allocation4], %s1785
        %s1787 = sand.u32 %s347, 1
        %s1788 = smul.addr %s1787, 24
        %s1789 = scalar_lea.vmem [#allocation5], %s1788
        %s1790 = sand.u32 %s35, 1
        %s1791 = scalar_lea.sflag [#allocation7], %s1790
        %s1792 = sand.u32 %s373, 1
        %s1793 = smul.addr %s1792, 24
        %s1794 = scalar_lea.vmem [#allocation6], %s1793
        %s1795 = sand.u32 %s35, 1
        %s1796 = scalar_lea.sflag [#allocation7], %s1795
        %s1797 = sand.u32 %s399, 1
        %s1798 = smul.addr %s1797, 24
        %s1799 = scalar_lea.vmem [#allocation8], %s1798
        // Predicated region
        $region81: #{tpu_custom_call.1} parent=75 // pred_check
          %p1800 = pneg %p357
        $region82: #{tpu_custom_call.1} parent=75 // pred_check_branch
          %1802 = sbr.rel (%p1800) target = $region84
        $region83: #{tpu_custom_call.1} parent=75 // pred_region
          %s1804 = ssub.s32 384, 384
          %1805 = vsyncadd %s1786, %s1804
          %s1806 = smul.addr %s35, 3
          %s1807 = smul.addr %s1806, 128
          %s1808 = scalar_lea.hbm %s14, %s1807
          %s1810 = sshll.u32 %s1789, 4
          %s1811 = int_to_ptr.vmem [resolvable:$true] %s1810
          %1813 = dma.vmem_to_hbm [thread:$0]  %s1811, 384, %s1808, %s1786
        $region84: #{tpu_custom_call.1} parent=75 // pred_fallthru
          _
        // Predicated region
        $region85: #{tpu_custom_call.1} parent=75 // pred_check
          %p1814 = pneg %p383
        $region86: #{tpu_custom_call.1} parent=75 // pred_check_branch
          %1816 = sbr.rel (%p1814) target = $region88
        $region87: #{tpu_custom_call.1} parent=75 // pred_region
          %s1818 = ssub.s32 384, 384
          %1819 = vsyncadd %s1791, %s1818
          %s1820 = smul.addr %s35, 3
          %s1821 = smul.addr %s1820, 128
          %s1822 = scalar_lea.hbm %s15, %s1821
          %s1824 = sshll.u32 %s1794, 4
          %s1825 = int_to_ptr.vmem [resolvable:$true] %s1824
          %1827 = dma.vmem_to_hbm [thread:$0]  %s1825, 384, %s1822, %s1791
        $region88: #{tpu_custom_call.1} parent=75 // pred_fallthru
          _
        // Predicated region
        $region89: #{tpu_custom_call.1} parent=75 // pred_check
          %p1828 = pneg %p409
        $region90: #{tpu_custom_call.1} parent=75 // pred_check_branch
          %1830 = sbr.rel (%p1828) target = $region92
        $region91: #{tpu_custom_call.1} parent=75 // pred_region
          %s1832 = ssub.s32 384, 384
          %1833 = vsyncadd %s1796, %s1832
          %s1834 = smul.addr %s35, 3
          %s1835 = smul.addr %s1834, 128
          %s1836 = scalar_lea.hbm %s16, %s1835
          %s1838 = sshll.u32 %s1799, 4
          %s1839 = int_to_ptr.vmem [resolvable:$true] %s1838
          %1841 = dma.vmem_to_hbm [thread:$0]  %s1839, 384, %s1836, %s1796
        $region92: #{tpu_custom_call.1} parent=75 // pred_fallthru
          _
      $region76: #{tpu_custom_call.1} parent=5 // pred_fallthru
        _
      %p1842 = scmp.le.s32.totalorder 2, %s30
      // Predicated region
      $region93: #{tpu_custom_call.1} parent=5 // pred_check
        %p1843 = pneg %p1842
      $region94: #{tpu_custom_call.1} parent=5 // pred_check_branch
        %1845 = sbr.rel (%p1843) target = $region96
      $region95: #{tpu_custom_call.1} parent=5 // pred_region
        %s1846 = ssub.s32 %s30, 2
        // Predicated region
        $region97: #{tpu_custom_call.1} parent=95 // pred_check
          %p1847 = pneg %p363
        $region98: #{tpu_custom_call.1} parent=95 // pred_check_branch
          %1849 = sbr.rel (%p1847) target = $region100
        $region99: #{tpu_custom_call.1} parent=95 // pred_region
          %s1850 = sand.u32 %s348, 1
          %s1851 = scalar_lea.sflag [#allocation4], %s1850
          %s1852 = sand.u32 %s348, 1
          %s1853 = smul.addr %s1852, 24
          %s1854 = scalar_lea.vmem [#allocation5], %s1853
          %1855 = dma.done %s1851, 384
        $region100: #{tpu_custom_call.1} parent=95 // pred_fallthru
          _
        // Predicated region
        $region101: #{tpu_custom_call.1} parent=95 // pred_check
          %p1856 = pneg %p389
        $region102: #{tpu_custom_call.1} parent=95 // pred_check_branch
          %1858 = sbr.rel (%p1856) target = $region104
        $region103: #{tpu_custom_call.1} parent=95 // pred_region
          %s1859 = sand.u32 %s36, 1
          %s1860 = scalar_lea.sflag [#allocation7], %s1859
          %s1861 = sand.u32 %s374, 1
          %s1862 = smul.addr %s1861, 24
          %s1863 = scalar_lea.vmem [#allocation6], %s1862
          %1864 = dma.done %s1860, 384
        $region104: #{tpu_custom_call.1} parent=95 // pred_fallthru
          _
        // Predicated region
        $region105: #{tpu_custom_call.1} parent=95 // pred_check
          %p1865 = pneg %p415
        $region106: #{tpu_custom_call.1} parent=95 // pred_check_branch
          %1867 = sbr.rel (%p1865) target = $region108
        $region107: #{tpu_custom_call.1} parent=95 // pred_region
          %s1868 = sand.u32 %s36, 1
          %s1869 = scalar_lea.sflag [#allocation7], %s1868
          %s1870 = sand.u32 %s400, 1
          %s1871 = smul.addr %s1870, 24
          %s1872 = scalar_lea.vmem [#allocation8], %s1871
          %1873 = dma.done %s1869, 384
        $region108: #{tpu_custom_call.1} parent=95 // pred_fallthru
          _
      $region96: #{tpu_custom_call.1} parent=5 // pred_fallthru
        _
    $region6: #{tpu_custom_call.1} parent=1 // loop_footer
      %s34 = sadd.s32 1, %s30
    $region7: #{tpu_custom_call.1} parent=1 // loop_footer_branch
      %29 = sbr.rel target = $region3
    $region8: #{tpu_custom_call.1} parent=1 // loop_exit
      _
    %1874 = vsyncpa [#allocation3], 1
    %s1875 = scalar_lea.sflag [#allocation3], 1
    %1876 = vsyncpa %s1875, 1
    %1877 = vsyncpa [#allocation4], 1
    %s1878 = scalar_lea.sflag [#allocation4], 1
    %1879 = vsyncpa %s1878, 1
    %1880 = vsyncpa [#allocation7], 1
    %s1881 = scalar_lea.sflag [#allocation7], 1
    %1882 = vsyncpa %s1881, 1

</llo_original>
